<compile_context>
chip_gen: v7x
topology: tpu7x:2x2x1
jax: 0.10.0
libtpu: 0.0.40
codegen_flags: <defaults>
</compile_context>

<pallas_src>
import jax
import jax.numpy as jnp
from jax.experimental import pallas as pl
from jax.experimental.pallas import tpu as pltpu


def _round_up(n, m):
    return ((n + m - 1) // m) * m


# --------------------------------------------------------------------------- #
# Kernels
# --------------------------------------------------------------------------- #
def _sigmoid_eup(y):
    # exp and the divide both land in the EUP slot (free filler under the MXU).
    return pl.reciprocal(1.0 + jnp.exp(-y), approx=True)


def _ae_resident_kernel(x_ref, w_enc_ref, b_enc_ref, w_dec_ref, b_dec_ref, o_ref):
    """Whole model per batch tile; weights stay VMEM-resident across the grid."""
    x = x_ref[...].astype(w_enc_ref.dtype)                       # in-kernel bf16 cast
    h = jnp.dot(x, w_enc_ref[...], preferred_element_type=jnp.float32)
    h = jnp.maximum(h + b_enc_ref[...], 0.0)                     # (TB,Hp) + (1,Hp)
    y = jnp.dot(h.astype(w_dec_ref.dtype), w_dec_ref[...],
                preferred_element_type=jnp.float32)
    y = y + b_dec_ref[...]                                       # (TB,Dp) + (1,Dp)
    o_ref[...] = _sigmoid_eup(y).astype(o_ref.dtype)


def _ae_streaming_kernel(x_ref, w_enc_ref, b_enc_ref, w_dec_ref, b_dec_ref,
                         o_ref, acc_ref):
    """Fallback when the weights do not fit VMEM: stream hidden-dim chunks.

    grid = (batch tiles, hidden chunks). For chunk c:
        h_c  = relu(x @ W_enc[:, c] + b_enc[c])
        acc += h_c @ W_dec[c, :]
    Bias + sigmoid epilogue on the last chunk. Exact because ReLU is element-wise
    per hidden unit and the decoder sums over hidden units.
    """
    hi = pl.program_id(1)

    @pl.when(hi == 0)
    def _():
        acc_ref[...] = jnp.zeros_like(acc_ref)

    x = x_ref[...].astype(w_enc_ref.dtype)
    h = jnp.dot(x, w_enc_ref[...], preferred_element_type=jnp.float32)
    h = jnp.maximum(h + b_enc_ref[...], 0.0)
    acc_ref[...] += jnp.dot(h.astype(w_dec_ref.dtype), w_dec_ref[...],
                            preferred_element_type=jnp.float32)

    @pl.when(hi == pl.num_programs(1) - 1)
    def _():
        y = acc_ref[...] + b_dec_ref[...]
        o_ref[...] = _sigmoid_eup(y).astype(o_ref.dtype)


# --------------------------------------------------------------------------- #
# Parameter preparation (done ONCE per model, not per forward call)
# --------------------------------------------------------------------------- #
def prepare_params(w_enc, b_enc, w_dec, b_dec, *,
                   compute_dtype=jnp.bfloat16, feature_align=None):
    """Pad feature dims to 128/256 and cast weights to bf16 once.

    w_enc: (input_size, hidden), w_dec: (hidden, input_size) (pre-transposed so the
    kernel computes x @ W + b). Biases may be 1-D or (1, features). Zero padding is
    numerically exact for the affine layers.
    """
    D, H = w_enc.shape
    assert w_dec.shape == (H, D), (w_enc.shape, w_dec.shape)
    if feature_align is None:
        # 256-wide passes fill the 256x256 MXU on v6e/v7x; only worth the extra
        # padding when the model is big enough to be compute-bound.
        feature_align = 256 if min(D, H) >= 1024 else 128
    D_pad = _round_up(D, feature_align)
    H_pad = _round_up(H, feature_align)

    wep = jnp.zeros((D_pad, H_pad), compute_dtype).at[:D, :H].set(
        w_enc.astype(compute_dtype))
    wdp = jnp.zeros((H_pad, D_pad), compute_dtype).at[:H, :D].set(
        w_dec.astype(compute_dtype))
    bep = jnp.zeros((1, H_pad), jnp.float32).at[0, :H].set(
        jnp.reshape(b_enc, (-1,)).astype(jnp.float32))
    bdp = jnp.zeros((1, D_pad), jnp.float32).at[0, :D].set(
        jnp.reshape(b_dec, (-1,)).astype(jnp.float32))
    return dict(w_enc=wep, b_enc=bep, w_dec=wdp, b_dec=bdp,
                input_size=D, hidden_size=H)


# --------------------------------------------------------------------------- #
# Tiling helpers
# --------------------------------------------------------------------------- #
def _choose_batch_tile(B, D_pad, bytes_per_row, *, target_step_bytes=2 << 20,
                       max_tb=2048, min_steps=4):
    """Batch tile: multiple of 128, divisor of round_up(B, 128) (no pad waste),
    sized so each grid step moves ~target_step_bytes of x+out traffic, while
    keeping >= min_steps grid steps when the batch allows."""
    B_pad = _round_up(max(B, 1), 128)
    n = B_pad // 128
    cands = sorted(128 * d for d in range(1, n + 1)
                   if n % d == 0 and 128 * d <= max_tb)
    target_rows = max(128, (target_step_bytes // max(bytes_per_row, 1)) // 128 * 128)
    tb = cands[0]
    for c in cands:
        if c <= target_rows:
            tb = c
    while tb > 128 and B_pad // tb < min_steps:
        smaller = [c for c in cands if c < tb]
        if not smaller:
            break
        tb = smaller[-1]
    return tb, B_pad


def _choose_hidden_tile(H_pad, D_pad, compute_itemsize, *, budget_bytes=16 << 20,
                        max_th=2048):
    """Hidden-dim chunk for the streaming fallback: divisor of H_pad, sized so the
    double-buffered (W_enc chunk + W_dec chunk) stay within budget_bytes."""
    n = H_pad // 128
    cands = sorted(128 * d for d in range(1, n + 1)
                   if n % d == 0 and 128 * d <= max_th)
    th = cands[0]
    for c in cands:
        if 2 * (2 * D_pad * c * compute_itemsize) <= budget_bytes:
            th = c
    return th


def _resident_param_specs(d_pad, h_pad, single_buffer_weights):
    """Constant-index-map specs for the VMEM-resident parameters. The weights are
    single-buffered (pl.Buffered(1)) when supported — they never change across the
    batch grid, so double-buffering them only wastes VMEM (matters on v7x)."""
    def wspec(shape):
        if single_buffer_weights:
            return pl.BlockSpec(shape, lambda i: (0, 0),
                                pipeline_mode=pl.Buffered(1))
        return pl.BlockSpec(shape, lambda i: (0, 0))
    return [wspec((d_pad, h_pad)),
            pl.BlockSpec((1, h_pad), lambda i: (0, 0)),
            wspec((h_pad, d_pad)),
            pl.BlockSpec((1, d_pad), lambda i: (0, 0))]


# --------------------------------------------------------------------------- #
# Forward
# --------------------------------------------------------------------------- #
_STREAM_THRESHOLD = 40 << 20    # resident footprint above this -> stream weights (v7x 64 MiB/TC)
_VMEM_CAP = 64 << 20            # smallest physical VMEM across v5e/v6e/v7x


def autoencoder_forward(x, params, *, out_dtype=jnp.bfloat16, force_streaming=False):
    """x: (B, input_size) -> (B, input_size) in `out_dtype`.

    Default output dtype is bf16 (per perf review) to halve the HBM write traffic
    of this memory-bound kernel; pass out_dtype=x.dtype for exact dtype parity.
    """
    wep, bep, wdp, bdp = (params["w_enc"], params["b_enc"],
                          params["w_dec"], params["b_dec"])
    D, H = params["input_size"], params["hidden_size"]
    D_pad, H_pad = wep.shape
    compute_dtype = wep.dtype
    compute_isz = jnp.dtype(compute_dtype).itemsize
    out_dtype = jnp.dtype(out_dtype if out_dtype is not None else x.dtype)

    B = x.shape[0]
    assert x.shape == (B, D), x.shape

    # ---- batch tiling (no pad waste beyond the 128-row minimum) ----
    bytes_per_row = D_pad * (jnp.dtype(x.dtype).itemsize + out_dtype.itemsize)
    TB, B_pad = _choose_batch_tile(B, D_pad, bytes_per_row)

    aligned = (B == B_pad) and (D == D_pad)
    if aligned:
        xk = x                      # kernel casts f32->bf16 in-register; no extra HBM pass
    else:
        # Ragged path: one pad+cast pass (exact for affine layers; padding sliced off).
        xk = jnp.zeros((B_pad, D_pad), compute_dtype).at[:B, :D].set(
            x.astype(compute_dtype))
    x_isz = jnp.dtype(xk.dtype).itemsize

    # ---- VMEM budgeting: resident weights vs streaming fallback ----
    weight_bytes = 2 * D_pad * H_pad * compute_isz
    bias_bytes = (H_pad + D_pad) * 4
    tile_bytes = 2 * TB * D_pad * (x_isz + out_dtype.itemsize)   # double-buffered x / out
    hidden_bytes = TB * H_pad * 4                                # f32 intermediate
    resident_need = weight_bytes + 2 * bias_bytes + tile_bytes + hidden_bytes
    use_streaming = force_streaming or resident_need > _STREAM_THRESHOLD

    cost = pl.CostEstimate(
        flops=2 * B_pad * (D_pad * H_pad + H_pad * D_pad),
        transcendentals=2 * B_pad * D_pad,                       # exp + reciprocal
        bytes_accessed=(B_pad * D_pad * x_isz + weight_bytes + bias_bytes
                        + B_pad * D_pad * out_dtype.itemsize),
    )
    out_shape = jax.ShapeDtypeStruct((B_pad, D_pad), out_dtype)

    if not use_streaming:
        # Headroom assumes weights might end up double-buffered (fallback path).
        vmem_limit = int(min(_VMEM_CAP,
                             max(16 << 20,
                                 1.25 * (resident_need + weight_bytes) + (2 << 20))))

        def _resident_call(single_buffer_weights):
            return pl.pallas_call(
                _ae_resident_kernel,
                out_shape=out_shape,
                grid=(B_pad // TB,),
                in_specs=[pl.BlockSpec((TB, D_pad), lambda i: (i, 0))]  # x: batch tiled
                         + _resident_param_specs(D_pad, H_pad, single_buffer_weights),
                out_specs=pl.BlockSpec((TB, D_pad), lambda i: (i, 0)),
                compiler_params=pltpu.CompilerParams(
                    dimension_semantics=("parallel",),       # megacore shard on v7x
                    vmem_limit_bytes=vmem_limit),
                cost_estimate=cost,
            )(xk, wep, bep, wdp, bdp)

        try:
            out = _resident_call(True)
        except Exception:
            # pipeline_mode=pl.Buffered(1) not supported on this jax/libtpu:
            # fall back to default double-buffered resident weights.
            out = _resident_call(False)
    else:
        TH = _choose_hidden_tile(H_pad, D_pad, compute_isz)
        chunk_bytes = 2 * (2 * D_pad * TH * compute_isz)         # both chunks, 2x buffered
        stream_need = (chunk_bytes + 2 * bias_bytes + tile_bytes
                       + TB * D_pad * 4 + TB * TH * 4)
        vmem_limit = int(min(_VMEM_CAP, max(16 << 20, 1.25 * stream_need + (2 << 20))))

        out = pl.pallas_call(
            _ae_streaming_kernel,
            out_shape=out_shape,
            grid=(B_pad // TB, H_pad // TH),
            in_specs=[
                pl.BlockSpec((TB, D_pad), lambda i, h: (i, 0)),   # x (reused across h)
                pl.BlockSpec((D_pad, TH), lambda i, h: (0, h)),   # W_enc column chunk
                pl.BlockSpec((1, TH), lambda i, h: (0, h)),       # b_enc chunk
                pl.BlockSpec((TH, D_pad), lambda i, h: (h, 0)),   # W_dec row chunk
                pl.BlockSpec((1, D_pad), lambda i, h: (0, 0)),    # b_dec resident
            ],
            out_specs=pl.BlockSpec((TB, D_pad), lambda i, h: (i, 0)),
            scratch_shapes=[pltpu.VMEM((TB, D_pad), jnp.float32)],
            compiler_params=pltpu.CompilerParams(
                dimension_semantics=("parallel", "arbitrary"),
                vmem_limit_bytes=vmem_limit),
            cost_estimate=cost,
        )(xk, wep, bep, wdp, bdp)

    if aligned:
        return out
    return out[:B, :D]


# --------------------------------------------------------------------------- #
# Init + self-test
# --------------------------------------------------------------------------- #
def init_params(key, input_size, hidden_size, dtype=jnp.float32):
    """PyTorch nn.Linear-style uniform(-1/sqrt(fan_in), 1/sqrt(fan_in)) init.
    Weights stored pre-transposed as (in_features, out_features)."""
    k1, k2, k3, k4 = jax.random.split(key, 4)
    lim_e = 1.0 / (input_size ** 0.5)
    lim_d = 1.0 / (hidden_size ** 0.5)
    w_enc = jax.random.uniform(k1, (input_size, hidden_size), dtype, -lim_e, lim_e)
    b_enc = jax.random.uniform(k2, (1, hidden_size), dtype, -lim_e, lim_e)
    w_dec = jax.random.uniform(k3, (hidden_size, input_size), dtype, -lim_d, lim_d)
    b_dec = jax.random.uniform(k4, (1, input_size), dtype, -lim_d, lim_d)
    return w_enc, b_enc, w_dec, b_dec


if __name__ == "__main__":
    key = jax.random.PRNGKey(0)
    kx, kp, kx2, kp2 = jax.random.split(key, 4)

    def reference(x, w_enc, b_enc, w_dec, b_dec):
        # Mirrors the kernel: bf16 MXU inputs, f32 accumulation, bf16 inter-layer cast.
        xb = x.astype(jnp.bfloat16).astype(jnp.float32)
        we = w_enc.astype(jnp.bfloat16).astype(jnp.float32)
        wd = w_dec.astype(jnp.bfloat16).astype(jnp.float32)
        be = jnp.reshape(b_enc, (1, -1)).astype(jnp.float32)
        bd = jnp.reshape(b_dec, (1, -1)).astype(jnp.float32)
        h = jnp.maximum(xb @ we + be, 0.0)
        h = h.astype(jnp.bfloat16).astype(jnp.float32)
        return jax.nn.sigmoid(h @ wd + bd)

    # 1) Small ragged shapes (exercises the pad + slice path).
    batch, input_size, hidden_size = 8, 64, 32
    x = jax.random.normal(kx, (batch, input_size), jnp.float32)
    w_enc, b_enc, w_dec, b_dec = init_params(kp, input_size, hidden_size)
    params = prepare_params(w_enc, b_enc, w_dec, b_dec)
    out = jax.block_until_ready(autoencoder_forward(x, params))
    assert out.shape == (batch, input_size)
    ref = reference(x, w_enc, b_enc, w_dec, b_dec)
    err = float(jnp.max(jnp.abs(out.astype(jnp.float32) - ref)))
    assert err < 2e-2, err

    # 2) 128-aligned shapes (fast path: no wrapper pad/cast, no output slice).
    batch2, input_size2, hidden_size2 = 256, 128, 128
    x2 = jax.random.normal(kx2, (batch2, input_size2), jnp.float32)
    w_enc2, b_enc2, w_dec2, b_dec2 = init_params(kp2, input_size2, hidden_size2)
    params2 = prepare_params(w_enc2, b_enc2, w_dec2, b_dec2)
    out2 = jax.block_until_ready(autoencoder_forward(x2, params2))
    assert out2.shape == (batch2, input_size2)
    ref2 = reference(x2, w_enc2, b_enc2, w_dec2, b_dec2)
    err2 = float(jnp.max(jnp.abs(out2.astype(jnp.float32) - ref2)))
    assert err2 < 2e-2, err2

    # 3) Weight-streaming fallback (forced), must match the resident path.
    out3 = jax.block_until_ready(
        autoencoder_forward(x2, params2, force_streaming=True))
    err3 = float(jnp.max(jnp.abs(out3.astype(jnp.float32) - ref2)))
    assert err3 < 2e-2, err3

    print("KERNEL_OK")
</pallas_src>

<mosaic_0001>
module attributes {stable_mosaic.version = 11 : i64} {
  func.func @_ae_resident_kernel(%arg0: i32, %arg1: memref<128x128xbf16, #tpu.memory_space<vmem>>, %arg2: memref<128x128xbf16, #tpu.memory_space<vmem>>, %arg3: memref<1x128xf32, #tpu.memory_space<vmem>>, %arg4: memref<128x128xbf16, #tpu.memory_space<vmem>>, %arg5: memref<1x128xf32, #tpu.memory_space<vmem>>, %arg6: memref<128x128xbf16, #tpu.memory_space<vmem>>) attributes {dimension_semantics = [#tpu.dimension_semantics<parallel>], iteration_bounds = array<i64: 1>, scalar_prefetch = 0 : i64, scratch_operands = 0 : i64, tpu.core_type = #tpu.core_type<tc>, window_params = [{transform_indices = @transform_0, window_bounds = array<i64: 128, 128>}, {pipeline_mode = #tpu.pipeline_mode<synchronous>, transform_indices = @transform_1, window_bounds = array<i64: 128, 128>}, {pipeline_mode = #tpu.pipeline_mode<synchronous>, transform_indices = @transform_2, window_bounds = array<i64: 1, 128>}, {pipeline_mode = #tpu.pipeline_mode<synchronous>, transform_indices = @transform_3, window_bounds = array<i64: 128, 128>}, {pipeline_mode = #tpu.pipeline_mode<synchronous>, transform_indices = @transform_4, window_bounds = array<i64: 1, 128>}, {transform_indices = @transform_5, window_bounds = array<i64: 128, 128>}]} {
    %c0 = arith.constant 0 : index
    %c0_0 = arith.constant 0 : index
    %0 = vector.load %arg1[%c0, %c0_0] : memref<128x128xbf16, #tpu.memory_space<vmem>>, vector<128x128xbf16>
    %c0_1 = arith.constant 0 : index
    %c0_2 = arith.constant 0 : index
    %1 = vector.load %arg2[%c0_1, %c0_2] : memref<128x128xbf16, #tpu.memory_space<vmem>>, vector<128x128xbf16>
    %cst = arith.constant dense<0.000000e+00> : vector<128x128xf32>
    %2 = tpu.matmul %0, %1, %cst {dimension_numbers = #tpu.dot_dimension_numbers<[1], [0], [0], [1], [0, 0, 1, 1], [], []>} : vector<128x128xbf16>, vector<128x128xbf16>, vector<128x128xf32> -> vector<128x128xf32>
    %c0_3 = arith.constant 0 : index
    %c0_4 = arith.constant 0 : index
    %3 = vector.load %arg3[%c0_3, %c0_4] : memref<1x128xf32, #tpu.memory_space<vmem>>, vector<1x128xf32>
    %4 = vector.broadcast %3 : vector<1x128xf32> to vector<128x128xf32>
    %5 = arith.addf %2, %4 : vector<128x128xf32>
    %cst_5 = arith.constant 0.000000e+00 : f32
    %6 = vector.broadcast %cst_5 : f32 to vector<128x128xf32>
    %7 = arith.maximumf %5, %6 : vector<128x128xf32>
    %8 = arith.truncf %7 : vector<128x128xf32> to vector<128x128xbf16>
    %c0_6 = arith.constant 0 : index
    %c0_7 = arith.constant 0 : index
    %9 = vector.load %arg4[%c0_6, %c0_7] : memref<128x128xbf16, #tpu.memory_space<vmem>>, vector<128x128xbf16>
    %cst_8 = arith.constant dense<0.000000e+00> : vector<128x128xf32>
    %10 = tpu.matmul %8, %9, %cst_8 {dimension_numbers = #tpu.dot_dimension_numbers<[1], [0], [0], [1], [0, 0, 1, 1], [], []>} : vector<128x128xbf16>, vector<128x128xbf16>, vector<128x128xf32> -> vector<128x128xf32>
    %c0_9 = arith.constant 0 : index
    %c0_10 = arith.constant 0 : index
    %11 = vector.load %arg5[%c0_9, %c0_10] : memref<1x128xf32, #tpu.memory_space<vmem>>, vector<1x128xf32>
    %12 = vector.broadcast %11 : vector<1x128xf32> to vector<128x128xf32>
    %13 = arith.addf %10, %12 : vector<128x128xf32>
    %cst_11 = arith.constant 0.000000e+00 : f32
    %14 = vector.broadcast %cst_11 : f32 to vector<128x128xf32>
    %15 = arith.subf %14, %13 : vector<128x128xf32>
    %16 = math.exp %15 : vector<128x128xf32>
    %cst_12 = arith.constant 1.000000e+00 : f32
    %17 = vector.broadcast %cst_12 : f32 to vector<128x128xf32>
    %18 = arith.addf %17, %16 : vector<128x128xf32>
    %19 = tpu.reciprocal %18 {approx = true} : vector<128x128xf32> -> vector<128x128xf32>
    %20 = arith.truncf %19 : vector<128x128xf32> to vector<128x128xbf16>
    %c0_13 = arith.constant 0 : index
    %c0_14 = arith.constant 0 : index
    %21 = vector.load %arg6[%c0_13, %c0_14] : memref<128x128xbf16, #tpu.memory_space<vmem>>, vector<128x128xbf16>
    tpu.vector_store %arg6[%c0_13, %c0_14], %20 {strides = array<i32>} : memref<128x128xbf16, #tpu.memory_space<vmem>>, vector<128x128xbf16>,
    return
  }
  func.func @transform_0(%arg0: i32) -> (i32, i32) {
    %c0_i32 = arith.constant 0 : i32
    %c0_i32_0 = arith.constant 0 : i32
    return %arg0, %c0_i32 : i32, i32
  }
  func.func @transform_1(%arg0: i32) -> (i32, i32) {
    %c0_i32 = arith.constant 0 : i32
    %c0_i32_0 = arith.constant 0 : i32
    %c0_i32_1 = arith.constant 0 : i32
    return %c0_i32, %c0_i32_0 : i32, i32
  }
  func.func @transform_2(%arg0: i32) -> (i32, i32) {
    %c0_i32 = arith.constant 0 : i32
    %c0_i32_0 = arith.constant 0 : i32
    %c0_i32_1 = arith.constant 0 : i32
    return %c0_i32, %c0_i32_0 : i32, i32
  }
  func.func @transform_3(%arg0: i32) -> (i32, i32) {
    %c0_i32 = arith.constant 0 : i32
    %c0_i32_0 = arith.constant 0 : i32
    %c0_i32_1 = arith.constant 0 : i32
    return %c0_i32, %c0_i32_0 : i32, i32
  }
  func.func @transform_4(%arg0: i32) -> (i32, i32) {
    %c0_i32 = arith.constant 0 : i32
    %c0_i32_0 = arith.constant 0 : i32
    %c0_i32_1 = arith.constant 0 : i32
    return %c0_i32, %c0_i32_0 : i32, i32
  }
  func.func @transform_5(%arg0: i32) -> (i32, i32) {
    %c0_i32 = arith.constant 0 : i32
    %c0_i32_0 = arith.constant 0 : i32
    return %arg0, %c0_i32 : i32, i32
  }
}

module attributes {stable_mosaic.version = 11 : i64} {
  func.func @_ae_resident_kernel(%arg0: i32, %arg1: memref<128x128xbf16, #tpu.memory_space<vmem>>, %arg2: memref<128x128xbf16, #tpu.memory_space<vmem>>, %arg3: memref<1x128xf32, #tpu.memory_space<vmem>>, %arg4: memref<128x128xbf16, #tpu.memory_space<vmem>>, %arg5: memref<1x128xf32, #tpu.memory_space<vmem>>, %arg6: memref<128x128xbf16, #tpu.memory_space<vmem>>) attributes {dimension_semantics = [#tpu.dimension_semantics<parallel>], iteration_bounds = array<i64: 1>, scalar_prefetch = 0 : i64, scratch_operands = 0 : i64, tpu.core_type = #tpu.core_type<tc>, window_params = [{transform_indices = @transform_0, window_bounds = array<i64: 128, 128>}, {pipeline_mode = #tpu.pipeline_mode<synchronous>, transform_indices = @transform_1, window_bounds = array<i64: 128, 128>}, {pipeline_mode = #tpu.pipeline_mode<synchronous>, transform_indices = @transform_2, window_bounds = array<i64: 1, 128>}, {pipeline_mode = #tpu.pipeline_mode<synchronous>, transform_indices = @transform_3, window_bounds = array<i64: 128, 128>}, {pipeline_mode = #tpu.pipeline_mode<synchronous>, transform_indices = @transform_4, window_bounds = array<i64: 1, 128>}, {transform_indices = @transform_5, window_bounds = array<i64: 128, 128>}]} {
    %c0 = arith.constant 0 : index
    %c0_0 = arith.constant 0 : index
    %0 = vector.load %arg1[%c0, %c0_0] : memref<128x128xbf16, #tpu.memory_space<vmem>>, vector<128x128xbf16>
    %c0_1 = arith.constant 0 : index
    %c0_2 = arith.constant 0 : index
    %1 = vector.load %arg2[%c0_1, %c0_2] : memref<128x128xbf16, #tpu.memory_space<vmem>>, vector<128x128xbf16>
    %cst = arith.constant dense<0.000000e+00> : vector<128x128xf32>
    %2 = tpu.matmul %0, %1, %cst {dimension_numbers = #tpu.dot_dimension_numbers<[1], [0], [0], [1], [0, 0, 1, 1], [], []>} : vector<128x128xbf16>, vector<128x128xbf16>, vector<128x128xf32> -> vector<128x128xf32>
    %c0_3 = arith.constant 0 : index
    %c0_4 = arith.constant 0 : index
    %3 = vector.load %arg3[%c0_3, %c0_4] : memref<1x128xf32, #tpu.memory_space<vmem>>, vector<1x128xf32>
    %4 = vector.broadcast %3 : vector<1x128xf32> to vector<128x128xf32>
    %5 = arith.addf %2, %4 : vector<128x128xf32>
    %cst_5 = arith.constant 0.000000e+00 : f32
    %6 = vector.broadcast %cst_5 : f32 to vector<128x128xf32>
    %7 = arith.maximumf %5, %6 : vector<128x128xf32>
    %8 = arith.truncf %7 : vector<128x128xf32> to vector<128x128xbf16>
    %c0_6 = arith.constant 0 : index
    %c0_7 = arith.constant 0 : index
    %9 = vector.load %arg4[%c0_6, %c0_7] : memref<128x128xbf16, #tpu.memory_space<vmem>>, vector<128x128xbf16>
    %cst_8 = arith.constant dense<0.000000e+00> : vector<128x128xf32>
    %10 = tpu.matmul %8, %9, %cst_8 {dimension_numbers = #tpu.dot_dimension_numbers<[1], [0], [0], [1], [0, 0, 1, 1], [], []>} : vector<128x128xbf16>, vector<128x128xbf16>, vector<128x128xf32> -> vector<128x128xf32>
    %c0_9 = arith.constant 0 : index
    %c0_10 = arith.constant 0 : index
    %11 = vector.load %arg5[%c0_9, %c0_10] : memref<1x128xf32, #tpu.memory_space<vmem>>, vector<1x128xf32>
    %12 = vector.broadcast %11 : vector<1x128xf32> to vector<128x128xf32>
    %13 = arith.addf %10, %12 : vector<128x128xf32>
    %cst_11 = arith.constant 0.000000e+00 : f32
    %14 = vector.broadcast %cst_11 : f32 to vector<128x128xf32>
    %15 = arith.subf %14, %13 : vector<128x128xf32>
    %16 = math.exp %15 : vector<128x128xf32>
    %cst_12 = arith.constant 1.000000e+00 : f32
    %17 = vector.broadcast %cst_12 : f32 to vector<128x128xf32>
    %18 = arith.addf %17, %16 : vector<128x128xf32>
    %19 = tpu.reciprocal %18 {approx = true} : vector<128x128xf32> -> vector<128x128xf32>
    %20 = arith.truncf %19 : vector<128x128xf32> to vector<128x128xbf16>
    %c0_13 = arith.constant 0 : index
    %c0_14 = arith.constant 0 : index
    %21 = vector.load %arg6[%c0_13, %c0_14] : memref<128x128xbf16, #tpu.memory_space<vmem>>, vector<128x128xbf16>
    tpu.vector_store %arg6[%c0_13, %c0_14], %20 {strides = array<i32>} : memref<128x128xbf16, #tpu.memory_space<vmem>>, vector<128x128xbf16>,
    return
  }
  func.func @transform_0(%arg0: i32) -> (i32, i32) {
    %c0_i32 = arith.constant 0 : i32
    %c0_i32_0 = arith.constant 0 : i32
    return %arg0, %c0_i32 : i32, i32
  }
  func.func @transform_1(%arg0: i32) -> (i32, i32) {
    %c0_i32 = arith.constant 0 : i32
    %c0_i32_0 = arith.constant 0 : i32
    %c0_i32_1 = arith.constant 0 : i32
    return %c0_i32, %c0_i32_0 : i32, i32
  }
  func.func @transform_2(%arg0: i32) -> (i32, i32) {
    %c0_i32 = arith.constant 0 : i32
    %c0_i32_0 = arith.constant 0 : i32
    %c0_i32_1 = arith.constant 0 : i32
    return %c0_i32, %c0_i32_0 : i32, i32
  }
  func.func @transform_3(%arg0: i32) -> (i32, i32) {
    %c0_i32 = arith.constant 0 : i32
    %c0_i32_0 = arith.constant 0 : i32
    %c0_i32_1 = arith.constant 0 : i32
    return %c0_i32, %c0_i32_0 : i32, i32
  }
  func.func @transform_4(%arg0: i32) -> (i32, i32) {
    %c0_i32 = arith.constant 0 : i32
    %c0_i32_0 = arith.constant 0 : i32
    %c0_i32_1 = arith.constant 0 : i32
    return %c0_i32, %c0_i32_0 : i32, i32
  }
  func.func @transform_5(%arg0: i32) -> (i32, i32) {
    %c0_i32 = arith.constant 0 : i32
    %c0_i32_0 = arith.constant 0 : i32
    return %arg0, %c0_i32 : i32, i32
  }
}

</mosaic_0001>

<llo_original>
// kernel: tpu_custom_call.1
$region0: #{tpu_custom_call.1}
  #allocation0 [shape = 'u32[]', space=smem, size = 0x4, offset = 0x4, fixed_abs, tag = 'smem constant byte address 0x4 - core index']
  #allocation1 [shape = 'u32[144,128]{1,0:T(1,128)}', space=vmem, size = 0x12000, scoped, tag = 'internal scratch']
  %s0 = inlined_call_operand.hbm [shape: bf16[128,128], index: 0, kind: input, shape index: {}]
  %s1 = inlined_call_operand.hbm [shape: bf16[128,128], index: 1, kind: input, shape index: {}]
  %s2 = inlined_call_operand.vmem [shape: f32[1,128], index: 2, kind: input, shape index: {}]
  %s3 = inlined_call_operand.hbm [shape: bf16[128,128], index: 3, kind: input, shape index: {}]
  %s4 = inlined_call_operand.vmem [shape: f32[1,128], index: 4, kind: input, shape index: {}]
  %s5 = inlined_call_operand.hbm [shape: bf16[128,128], index: 5, kind: output, shape index: {}]
  %s6 = sld [smem:[#allocation0]]
  $region42: #{tpu_custom_call.1} parent=0
    _
  %s8 = ssub.s32 1, %s6
  %s9 = scalar_select 0, %s8, %s6
  $region1: #{tpu_custom_call.1} parent=0
    #allocation2 [shape = 'u8[32768]{0}', space=vmem, size = 0x8000, scoped, tag = 'input window, operand 0, single buffered']
    #allocation3 [shape = 's32[1]{0}', space=sflag, size = 0x4, scoped, tag = 'scoped memory for tpu_custom_call.1']
    #allocation4 [shape = 's32[1]{0}', space=sflag, size = 0x4, scoped, tag = 'scoped memory for tpu_custom_call.1']
    #allocation5 [shape = 'u8[32768]{0}', space=vmem, size = 0x8000, scoped, tag = 'input window, operand 1, single buffered']
    #allocation6 [shape = 's32[1]{0}', space=sflag, size = 0x4, scoped, tag = 'scoped memory for tpu_custom_call.1']
    #allocation7 [shape = 'u8[32768]{0}', space=vmem, size = 0x8000, scoped, tag = 'input window, operand 3, single buffered']
    #allocation8 [shape = 'u8[32768]{0}', space=vmem, size = 0x8000, scoped, tag = 'output window, operand 0, single buffered']
    %10 = vsyncpa [#allocation3], 0
    %11 = vsyncpa [#allocation6], 0
    %12 = vsyncpa [#allocation4], 0
    // Predicated region
    $region2: #{tpu_custom_call.1} parent=1 // pred_check
      _
    $region3: #{tpu_custom_call.1} parent=1 // pred_check_branch
      %14 = sbr.rel (0) target = $region5
    $region4: #{tpu_custom_call.1} parent=1 // pred_region
      %s16 = ssub.s32 1024, 1024
      %17 = vsyncadd [#allocation3], %s16
      %s18 = sshll.u32 [#allocation2], 4
      %s19 = int_to_ptr.vmem [resolvable:$true] %s18
      %24 = dma.hbm_to_vmem [thread:$0]  %s0, 1024, %s19, [#allocation3], 64, 64, 4
    $region5: #{tpu_custom_call.1} parent=1 // pred_fallthru
      _
    // Predicated region
    $region6: #{tpu_custom_call.1} parent=1 // pred_check
      _
    $region7: #{tpu_custom_call.1} parent=1 // pred_check_branch
      %26 = sbr.rel (0) target = $region9
    $region8: #{tpu_custom_call.1} parent=1 // pred_region
      %s28 = ssub.s32 1024, 1024
      %29 = vsyncadd [#allocation6], %s28
      %s30 = sshll.u32 [#allocation5], 4
      %s31 = int_to_ptr.vmem [resolvable:$true] %s30
      %36 = dma.hbm_to_vmem [thread:$0]  %s1, 1024, %s31, [#allocation6], 64, 64, 4
    $region9: #{tpu_custom_call.1} parent=1 // pred_fallthru
      _
    // Predicated region
    $region10: #{tpu_custom_call.1} parent=1 // pred_check
      _
    $region11: #{tpu_custom_call.1} parent=1 // pred_check_branch
      %38 = sbr.rel (0) target = $region13
    $region12: #{tpu_custom_call.1} parent=1 // pred_region
      _
    $region13: #{tpu_custom_call.1} parent=1 // pred_fallthru
      _
    // Predicated region
    $region14: #{tpu_custom_call.1} parent=1 // pred_check
      _
    $region15: #{tpu_custom_call.1} parent=1 // pred_check_branch
      %40 = sbr.rel (0) target = $region17
    $region16: #{tpu_custom_call.1} parent=1 // pred_region
      %s42 = ssub.s32 1024, 1024
      %43 = vsyncadd [#allocation6], %s42
      %s44 = sshll.u32 [#allocation7], 4
      %s45 = int_to_ptr.vmem [resolvable:$true] %s44
      %50 = dma.hbm_to_vmem [thread:$0]  %s3, 1024, %s45, [#allocation6], 64, 64, 4
    $region17: #{tpu_custom_call.1} parent=1 // pred_fallthru
      _
    // Predicated region
    $region18: #{tpu_custom_call.1} parent=1 // pred_check
      _
    $region19: #{tpu_custom_call.1} parent=1 // pred_check_branch
      %52 = sbr.rel (0) target = $region21
    $region20: #{tpu_custom_call.1} parent=1 // pred_region
      _
    $region21: #{tpu_custom_call.1} parent=1 // pred_fallthru
      _
    // Predicated region
    $region22: #{tpu_custom_call.1} parent=1 // pred_check
      _
    $region23: #{tpu_custom_call.1} parent=1 // pred_check_branch
      %54 = sbr.rel (0) target = $region25
    $region24: #{tpu_custom_call.1} parent=1 // pred_region
      %55 = dma.done [#allocation3], 1024
    $region25: #{tpu_custom_call.1} parent=1 // pred_fallthru
      _
    // Predicated region
    $region26: #{tpu_custom_call.1} parent=1 // pred_check
      _
    $region27: #{tpu_custom_call.1} parent=1 // pred_check_branch
      %57 = sbr.rel (0) target = $region29
    $region28: #{tpu_custom_call.1} parent=1 // pred_region
      %58 = dma.done [#allocation6], 1024
    $region29: #{tpu_custom_call.1} parent=1 // pred_fallthru
      _
    // Predicated region
    $region30: #{tpu_custom_call.1} parent=1 // pred_check
      _
    $region31: #{tpu_custom_call.1} parent=1 // pred_check_branch
      %60 = sbr.rel (0) target = $region33
    $region32: #{tpu_custom_call.1} parent=1 // pred_region
      %61 = dma.done [#allocation6], 1024
    $region33: #{tpu_custom_call.1} parent=1 // pred_fallthru
      _
    %v63 = vld [vmem:[#allocation2] sm:$0xf]
    %v64 = vld [vmem:[#allocation2 + $0x4] sm:$0xf]
    %v65 = vld [vmem:[#allocation2 + $0x8] sm:$0xf]
    %v66 = vld [vmem:[#allocation2 + $0xc] sm:$0xf]
    %v67 = vld [vmem:[#allocation2 + $0x10] sm:$0xf]
    %v68 = vld [vmem:[#allocation2 + $0x14] sm:$0xf]
    %v69 = vld [vmem:[#allocation2 + $0x18] sm:$0xf]
    %v70 = vld [vmem:[#allocation2 + $0x1c] sm:$0xf]
    %v71 = vld [vmem:[#allocation2 + $0x20] sm:$0xf]
    %v72 = vld [vmem:[#allocation2 + $0x24] sm:$0xf]
    %v73 = vld [vmem:[#allocation2 + $0x28] sm:$0xf]
    %v74 = vld [vmem:[#allocation2 + $0x2c] sm:$0xf]
    %v75 = vld [vmem:[#allocation2 + $0x30] sm:$0xf]
    %v76 = vld [vmem:[#allocation2 + $0x34] sm:$0xf]
    %v77 = vld [vmem:[#allocation2 + $0x38] sm:$0xf]
    %v78 = vld [vmem:[#allocation2 + $0x3c] sm:$0xf]
    %v79 = vld [vmem:[#allocation5] sm:$0xf]
    %v80 = vld [vmem:[#allocation5 + $0x4] sm:$0xf]
    %v81 = vld [vmem:[#allocation5 + $0x8] sm:$0xf]
    %v82 = vld [vmem:[#allocation5 + $0xc] sm:$0xf]
    %v83 = vld [vmem:[#allocation5 + $0x10] sm:$0xf]
    %v84 = vld [vmem:[#allocation5 + $0x14] sm:$0xf]
    %v85 = vld [vmem:[#allocation5 + $0x18] sm:$0xf]
    %v86 = vld [vmem:[#allocation5 + $0x1c] sm:$0xf]
    %v87 = vld [vmem:[#allocation5 + $0x20] sm:$0xf]
    %v88 = vld [vmem:[#allocation5 + $0x24] sm:$0xf]
    %v89 = vld [vmem:[#allocation5 + $0x28] sm:$0xf]
    %v90 = vld [vmem:[#allocation5 + $0x2c] sm:$0xf]
    %v91 = vld [vmem:[#allocation5 + $0x30] sm:$0xf]
    %v92 = vld [vmem:[#allocation5 + $0x34] sm:$0xf]
    %v93 = vld [vmem:[#allocation5 + $0x38] sm:$0xf]
    %v94 = vld [vmem:[#allocation5 + $0x3c] sm:$0xf]
    %v95 = vld [vmem:[%s2] sm:$0x1]
    %v97 = vlaneseq
    %v98 = vshrl.u32 %v97, 7
    %v99 = vsub.s32 0, %v98
    %v100 = vrot.slane %v95, %v99
    %v118 = vunpack.c.l.b16 %v63
    %v119 = vunpack.c.l.b16 %v64
    %v120 = vunpack.c.l.b16 %v65
    %v121 = vunpack.c.l.b16 %v66
    %v122 = vunpack.c.l.b16 %v67
    %v123 = vunpack.c.l.b16 %v68
    %v124 = vunpack.c.l.b16 %v69
    %v125 = vunpack.c.l.b16 %v70
    %v126 = vunpack.c.l.b16 %v71
    %v127 = vunpack.c.l.b16 %v72
    %v128 = vunpack.c.l.b16 %v73
    %v129 = vunpack.c.l.b16 %v74
    %v130 = vunpack.c.l.b16 %v75
    %v131 = vunpack.c.l.b16 %v76
    %v132 = vunpack.c.l.b16 %v77
    %v133 = vunpack.c.l.b16 %v78
    %v134 = vpack.c.b16 %v119, %v118
    %v135 = vpack.c.b16 %v121, %v120
    %v136 = vpack.c.b16 %v123, %v122
    %v137 = vpack.c.b16 %v125, %v124
    %v138 = vpack.c.b16 %v127, %v126
    %v139 = vpack.c.b16 %v129, %v128
    %v140 = vpack.c.b16 %v131, %v130
    %v141 = vpack.c.b16 %v133, %v132
    %v166 = vunpack.c.l.b16 %v79
    %v167 = vunpack.c.l.b16 %v80
    %v168 = vunpack.c.l.b16 %v81
    %v169 = vunpack.c.l.b16 %v82
    %v170 = vunpack.c.l.b16 %v83
    %v171 = vunpack.c.l.b16 %v84
    %v172 = vunpack.c.l.b16 %v85
    %v173 = vunpack.c.l.b16 %v86
    %v174 = vunpack.c.l.b16 %v87
    %v175 = vunpack.c.l.b16 %v88
    %v176 = vunpack.c.l.b16 %v89
    %v177 = vunpack.c.l.b16 %v90
    %v178 = vunpack.c.l.b16 %v91
    %v179 = vunpack.c.l.b16 %v92
    %v180 = vunpack.c.l.b16 %v93
    %v181 = vunpack.c.l.b16 %v94
    %v182 = vpack.c.b16 %v167, %v166
    %v183 = vpack.c.b16 %v169, %v168
    %v184 = vpack.c.b16 %v171, %v170
    %v185 = vpack.c.b16 %v173, %v172
    %v186 = vpack.c.b16 %v175, %v174
    %v187 = vpack.c.b16 %v177, %v176
    %v188 = vpack.c.b16 %v179, %v178
    %v189 = vpack.c.b16 %v181, %v180
    %198 = vmatprep.subr.bf16.mxu0 0
    %199 = vmatpush1.bf16.msra.mxu0 %v182
    %200 = vmatprep.subr.bf16.mxu0 0
    %201 = vmatpush1.bf16.msra.mxu0 %v183
    %202 = vmatprep.subr.bf16.mxu0 0
    %203 = vmatpush1.bf16.msra.mxu0 %v184
    %204 = vmatprep.subr.bf16.mxu0 0
    %205 = vmatpush1.bf16.msra.mxu0 %v185
    %206 = vmatprep.subr.bf16.mxu0 0
    %207 = vmatpush1.bf16.msra.mxu0 %v186
    %208 = vmatprep.subr.bf16.mxu0 0
    %209 = vmatpush1.bf16.msra.mxu0 %v187
    %210 = vmatprep.subr.bf16.mxu0 0
    %211 = vmatpush1.bf16.msra.mxu0 %v188
    %212 = vmatprep.subr.bf16.mxu0 0
    %213 = vmatpush1.bf16.msra.mxu0 %v189
    %214 = vmatprep.subr.bf16.mxu0 0
    %215 = vmatpush1.bf16.msra.mxu0 0
    %216 = vmatprep.subr.bf16.mxu0 0
    %217 = vmatpush1.bf16.msra.mxu0 0
    %218 = vmatprep.subr.bf16.mxu0 0
    %219 = vmatpush1.bf16.msra.mxu0 0
    %220 = vmatprep.subr.bf16.mxu0 0
    %221 = vmatpush1.bf16.msra.mxu0 0
    %222 = vmatprep.subr.bf16.mxu0 0
    %223 = vmatpush1.bf16.msra.mxu0 0
    %224 = vmatprep.subr.bf16.mxu0 0
    %225 = vmatpush1.bf16.msra.mxu0 0
    %226 = vmatprep.subr.bf16.mxu0 0
    %227 = vmatpush1.bf16.msra.mxu0 0
    %228 = vmatprep.subr.bf16.mxu0 0
    %229 = vmatpush1.bf16.msra.mxu0 0
    %230 = vmatprep.mubr.bf16.mxu0 0
    %231 = vmatmul.mubr.bf16.gmra.mrb[0].mxu0 %v134
    %v232 = vpop.f32.mrb[0].mxu0
    %v233 = vadd.f32 %v100, %v232
    %v234 = vpop.f32.mrb[0].mxu0
    %v235 = vpop.f32.mrb[0].mxu0
    %v236 = vadd.f32 %v100, %v235
    %v237 = vpop.f32.mrb[0].mxu0
    %238 = vmatprep.mubr.bf16.mxu0 0
    %239 = vmatmul.mubr.bf16.gmra.mrb[0].mxu0 %v135
    %v240 = vpop.f32.mrb[0].mxu0
    %v241 = vadd.f32 %v100, %v240
    %v242 = vpop.f32.mrb[0].mxu0
    %v243 = vpop.f32.mrb[0].mxu0
    %v244 = vadd.f32 %v100, %v243
    %v245 = vpop.f32.mrb[0].mxu0
    %246 = vmatprep.mubr.bf16.mxu0 0
    %247 = vmatmul.mubr.bf16.gmra.mrb[0].mxu0 %v136
    %v248 = vpop.f32.mrb[0].mxu0
    %v249 = vadd.f32 %v100, %v248
    %v250 = vpop.f32.mrb[0].mxu0
    %v251 = vpop.f32.mrb[0].mxu0
    %v252 = vadd.f32 %v100, %v251
    %v253 = vpop.f32.mrb[0].mxu0
    %254 = vmatprep.mubr.bf16.mxu0 0
    %255 = vmatmul.mubr.bf16.gmra.mrb[0].mxu0 %v137
    %v256 = vpop.f32.mrb[0].mxu0
    %v257 = vadd.f32 %v100, %v256
    %v258 = vpop.f32.mrb[0].mxu0
    %v259 = vpop.f32.mrb[0].mxu0
    %v260 = vadd.f32 %v100, %v259
    %v261 = vpop.f32.mrb[0].mxu0
    %262 = vmatprep.mubr.bf16.mxu0 0
    %263 = vmatmul.mubr.bf16.gmra.mrb[0].mxu0 %v138
    %v264 = vpop.f32.mrb[0].mxu0
    %v265 = vadd.f32 %v100, %v264
    %v266 = vpop.f32.mrb[0].mxu0
    %v267 = vpop.f32.mrb[0].mxu0
    %v268 = vadd.f32 %v100, %v267
    %v269 = vpop.f32.mrb[0].mxu0
    %270 = vmatprep.mubr.bf16.mxu0 0
    %271 = vmatmul.mubr.bf16.gmra.mrb[0].mxu0 %v139
    %v272 = vpop.f32.mrb[0].mxu0
    %v273 = vadd.f32 %v100, %v272
    %v274 = vpop.f32.mrb[0].mxu0
    %v275 = vpop.f32.mrb[0].mxu0
    %v276 = vadd.f32 %v100, %v275
    %v277 = vpop.f32.mrb[0].mxu0
    %278 = vmatprep.mubr.bf16.mxu0 0
    %279 = vmatmul.mubr.bf16.gmra.mrb[0].mxu0 %v140
    %v280 = vpop.f32.mrb[0].mxu0
    %v281 = vadd.f32 %v100, %v280
    %v282 = vpop.f32.mrb[0].mxu0
    %v283 = vpop.f32.mrb[0].mxu0
    %v284 = vadd.f32 %v100, %v283
    %v285 = vpop.f32.mrb[0].mxu0
    %286 = vmatprep.mubr.bf16.mxu0 0
    %287 = vmatmul.mubr.bf16.gmra.mrb[0].mxu0 %v141
    %v288 = vpop.f32.mrb[0].mxu0
    %v289 = vadd.f32 %v100, %v288
    %v290 = vpop.f32.mrb[0].mxu0
    %v291 = vpop.f32.mrb[0].mxu0
    %v292 = vadd.f32 %v100, %v291
    %v293 = vpop.f32.mrb[0].mxu0
    %294 = vdwg.mxu0
    %v295 = vmax.f32 %v233, 0.0
    %v296 = vmax.f32 %v236, 0.0
    %v297 = vmax.f32 %v241, 0.0
    %v298 = vmax.f32 %v244, 0.0
    %v299 = vmax.f32 %v249, 0.0
    %v300 = vmax.f32 %v252, 0.0
    %v301 = vmax.f32 %v257, 0.0
    %v302 = vmax.f32 %v260, 0.0
    %v303 = vmax.f32 %v265, 0.0
    %v304 = vmax.f32 %v268, 0.0
    %v305 = vmax.f32 %v273, 0.0
    %v306 = vmax.f32 %v276, 0.0
    %v307 = vmax.f32 %v281, 0.0
    %v308 = vmax.f32 %v284, 0.0
    %v309 = vmax.f32 %v289, 0.0
    %v310 = vmax.f32 %v292, 0.0
    %v311 = vpack.c.bf16 %v296, %v295
    %v312 = vpack.c.bf16 %v298, %v297
    %v313 = vpack.c.bf16 %v300, %v299
    %v314 = vpack.c.bf16 %v302, %v301
    %v315 = vpack.c.bf16 %v304, %v303
    %v316 = vpack.c.bf16 %v306, %v305
    %v317 = vpack.c.bf16 %v308, %v307
    %v318 = vpack.c.bf16 %v310, %v309
    %v319 = vld [vmem:[#allocation7] sm:$0xf]
    %v320 = vld [vmem:[#allocation7 + $0x4] sm:$0xf]
    %v321 = vld [vmem:[#allocation7 + $0x8] sm:$0xf]
    %v322 = vld [vmem:[#allocation7 + $0xc] sm:$0xf]
    %v323 = vld [vmem:[#allocation7 + $0x10] sm:$0xf]
    %v324 = vld [vmem:[#allocation7 + $0x14] sm:$0xf]
    %v325 = vld [vmem:[#allocation7 + $0x18] sm:$0xf]
    %v326 = vld [vmem:[#allocation7 + $0x1c] sm:$0xf]
    %v327 = vld [vmem:[#allocation7 + $0x20] sm:$0xf]
    %v328 = vld [vmem:[#allocation7 + $0x24] sm:$0xf]
    %v329 = vld [vmem:[#allocation7 + $0x28] sm:$0xf]
    %v330 = vld [vmem:[#allocation7 + $0x2c] sm:$0xf]
    %v331 = vld [vmem:[#allocation7 + $0x30] sm:$0xf]
    %v332 = vld [vmem:[#allocation7 + $0x34] sm:$0xf]
    %v333 = vld [vmem:[#allocation7 + $0x38] sm:$0xf]
    %v334 = vld [vmem:[#allocation7 + $0x3c] sm:$0xf]
    %v335 = vld [vmem:[%s4] sm:$0x1]
    %v337 = vlaneseq
    %v338 = vshrl.u32 %v337, 7
    %v339 = vsub.s32 0, %v338
    %v340 = vrot.slane %v335, %v339
    %v358 = vunpack.c.l.b16 %v319
    %v359 = vunpack.c.l.b16 %v320
    %v360 = vunpack.c.l.b16 %v321
    %v361 = vunpack.c.l.b16 %v322
    %v362 = vunpack.c.l.b16 %v323
    %v363 = vunpack.c.l.b16 %v324
    %v364 = vunpack.c.l.b16 %v325
    %v365 = vunpack.c.l.b16 %v326
    %v366 = vunpack.c.l.b16 %v327
    %v367 = vunpack.c.l.b16 %v328
    %v368 = vunpack.c.l.b16 %v329
    %v369 = vunpack.c.l.b16 %v330
    %v370 = vunpack.c.l.b16 %v331
    %v371 = vunpack.c.l.b16 %v332
    %v372 = vunpack.c.l.b16 %v333
    %v373 = vunpack.c.l.b16 %v334
    %v374 = vpack.c.b16 %v359, %v358
    %v375 = vpack.c.b16 %v361, %v360
    %v376 = vpack.c.b16 %v363, %v362
    %v377 = vpack.c.b16 %v365, %v364
    %v378 = vpack.c.b16 %v367, %v366
    %v379 = vpack.c.b16 %v369, %v368
    %v380 = vpack.c.b16 %v371, %v370
    %v381 = vpack.c.b16 %v373, %v372
    %390 = vmatprep.subr.bf16.mxu0 0
    %391 = vmatpush1.bf16.msra.mxu0 %v374
    %392 = vmatprep.subr.bf16.mxu0 0
    %393 = vmatpush1.bf16.msra.mxu0 %v375
    %394 = vmatprep.subr.bf16.mxu0 0
    %395 = vmatpush1.bf16.msra.mxu0 %v376
    %396 = vmatprep.subr.bf16.mxu0 0
    %397 = vmatpush1.bf16.msra.mxu0 %v377
    %398 = vmatprep.subr.bf16.mxu0 0
    %399 = vmatpush1.bf16.msra.mxu0 %v378
    %400 = vmatprep.subr.bf16.mxu0 0
    %401 = vmatpush1.bf16.msra.mxu0 %v379
    %402 = vmatprep.subr.bf16.mxu0 0
    %403 = vmatpush1.bf16.msra.mxu0 %v380
    %404 = vmatprep.subr.bf16.mxu0 0
    %405 = vmatpush1.bf16.msra.mxu0 %v381
    %406 = vmatprep.subr.bf16.mxu0 0
    %407 = vmatpush1.bf16.msra.mxu0 0
    %408 = vmatprep.subr.bf16.mxu0 0
    %409 = vmatpush1.bf16.msra.mxu0 0
    %410 = vmatprep.subr.bf16.mxu0 0
    %411 = vmatpush1.bf16.msra.mxu0 0
    %412 = vmatprep.subr.bf16.mxu0 0
    %413 = vmatpush1.bf16.msra.mxu0 0
    %414 = vmatprep.subr.bf16.mxu0 0
    %415 = vmatpush1.bf16.msra.mxu0 0
    %416 = vmatprep.subr.bf16.mxu0 0
    %417 = vmatpush1.bf16.msra.mxu0 0
    %418 = vmatprep.subr.bf16.mxu0 0
    %419 = vmatpush1.bf16.msra.mxu0 0
    %420 = vmatprep.subr.bf16.mxu0 0
    %421 = vmatpush1.bf16.msra.mxu0 0
    %422 = vmatprep.mubr.bf16.mxu0 0
    %423 = vmatmul.mubr.bf16.gmra.mrb[0].mxu0 %v311
    %v424 = vpop.f32.mrb[0].mxu0
    %v425 = vadd.f32 %v340, %v424
    %v426 = vpop.f32.mrb[0].mxu0
    %v427 = vpop.f32.mrb[0].mxu0
    %v428 = vadd.f32 %v340, %v427
    %v429 = vpop.f32.mrb[0].mxu0
    %430 = vmatprep.mubr.bf16.mxu0 0
    %431 = vmatmul.mubr.bf16.gmra.mrb[0].mxu0 %v312
    %v432 = vpop.f32.mrb[0].mxu0
    %v433 = vadd.f32 %v340, %v432
    %v434 = vpop.f32.mrb[0].mxu0
    %v435 = vpop.f32.mrb[0].mxu0
    %v436 = vadd.f32 %v340, %v435
    %v437 = vpop.f32.mrb[0].mxu0
    %438 = vmatprep.mubr.bf16.mxu0 0
    %439 = vmatmul.mubr.bf16.gmra.mrb[0].mxu0 %v313
    %v440 = vpop.f32.mrb[0].mxu0
    %v441 = vadd.f32 %v340, %v440
    %v442 = vpop.f32.mrb[0].mxu0
    %v443 = vpop.f32.mrb[0].mxu0
    %v444 = vadd.f32 %v340, %v443
    %v445 = vpop.f32.mrb[0].mxu0
    %446 = vmatprep.mubr.bf16.mxu0 0
    %447 = vmatmul.mubr.bf16.gmra.mrb[0].mxu0 %v314
    %v448 = vpop.f32.mrb[0].mxu0
    %v449 = vadd.f32 %v340, %v448
    %v450 = vpop.f32.mrb[0].mxu0
    %v451 = vpop.f32.mrb[0].mxu0
    %v452 = vadd.f32 %v340, %v451
    %v453 = vpop.f32.mrb[0].mxu0
    %454 = vmatprep.mubr.bf16.mxu0 0
    %455 = vmatmul.mubr.bf16.gmra.mrb[0].mxu0 %v315
    %v456 = vpop.f32.mrb[0].mxu0
    %v457 = vadd.f32 %v340, %v456
    %v458 = vpop.f32.mrb[0].mxu0
    %v459 = vpop.f32.mrb[0].mxu0
    %v460 = vadd.f32 %v340, %v459
    %v461 = vpop.f32.mrb[0].mxu0
    %462 = vmatprep.mubr.bf16.mxu0 0
    %463 = vmatmul.mubr.bf16.gmra.mrb[0].mxu0 %v316
    %v464 = vpop.f32.mrb[0].mxu0
    %v465 = vadd.f32 %v340, %v464
    %v466 = vpop.f32.mrb[0].mxu0
    %v467 = vpop.f32.mrb[0].mxu0
    %v468 = vadd.f32 %v340, %v467
    %v469 = vpop.f32.mrb[0].mxu0
    %470 = vmatprep.mubr.bf16.mxu0 0
    %471 = vmatmul.mubr.bf16.gmra.mrb[0].mxu0 %v317
    %v472 = vpop.f32.mrb[0].mxu0
    %v473 = vadd.f32 %v340, %v472
    %v474 = vpop.f32.mrb[0].mxu0
    %v475 = vpop.f32.mrb[0].mxu0
    %v476 = vadd.f32 %v340, %v475
    %v477 = vpop.f32.mrb[0].mxu0
    %478 = vmatprep.mubr.bf16.mxu0 0
    %479 = vmatmul.mubr.bf16.gmra.mrb[0].mxu0 %v318
    %v480 = vpop.f32.mrb[0].mxu0
    %v481 = vadd.f32 %v340, %v480
    %v482 = vpop.f32.mrb[0].mxu0
    %v483 = vpop.f32.mrb[0].mxu0
    %v484 = vadd.f32 %v340, %v483
    %v485 = vpop.f32.mrb[0].mxu0
    %486 = vdwg.mxu0
    %v487 = vsub.f32 0.0, %v425
    %v488 = vsub.f32 0.0, %v428
    %v489 = vsub.f32 0.0, %v433
    %v490 = vsub.f32 0.0, %v436
    %v491 = vsub.f32 0.0, %v441
    %v492 = vsub.f32 0.0, %v444
    %v493 = vsub.f32 0.0, %v449
    %v494 = vsub.f32 0.0, %v452
    %v495 = vsub.f32 0.0, %v457
    %v496 = vsub.f32 0.0, %v460
    %v497 = vsub.f32 0.0, %v465
    %v498 = vsub.f32 0.0, %v468
    %v499 = vsub.f32 0.0, %v473
    %v500 = vsub.f32 0.0, %v476
    %v501 = vsub.f32 0.0, %v481
    %v502 = vsub.f32 0.0, %v484
    %v503 = vmul.f32 %v487, 1.442695
    %v504 = vpow.pop %v503
    %v505 = vmul.f32 %v488, 1.442695
    %v506 = vpow.pop %v505
    %v507 = vmul.f32 %v489, 1.442695
    %v508 = vpow.pop %v507
    %v509 = vmul.f32 %v490, 1.442695
    %v510 = vpow.pop %v509
    %v511 = vmul.f32 %v491, 1.442695
    %v512 = vpow.pop %v511
    %v513 = vmul.f32 %v492, 1.442695
    %v514 = vpow.pop %v513
    %v515 = vmul.f32 %v493, 1.442695
    %v516 = vpow.pop %v515
    %v517 = vmul.f32 %v494, 1.442695
    %v518 = vpow.pop %v517
    %v519 = vmul.f32 %v495, 1.442695
    %v520 = vpow.pop %v519
    %v521 = vmul.f32 %v496, 1.442695
    %v522 = vpow.pop %v521
    %v523 = vmul.f32 %v497, 1.442695
    %v524 = vpow.pop %v523
    %v525 = vmul.f32 %v498, 1.442695
    %v526 = vpow.pop %v525
    %v527 = vmul.f32 %v499, 1.442695
    %v528 = vpow.pop %v527
    %v529 = vmul.f32 %v500, 1.442695
    %v530 = vpow.pop %v529
    %v531 = vmul.f32 %v501, 1.442695
    %v532 = vpow.pop %v531
    %v533 = vmul.f32 %v502, 1.442695
    %v534 = vpow.pop %v533
    %v535 = vadd.f32 %v504, 1.0
    %v536 = vadd.f32 %v506, 1.0
    %v537 = vadd.f32 %v508, 1.0
    %v538 = vadd.f32 %v510, 1.0
    %v539 = vadd.f32 %v512, 1.0
    %v540 = vadd.f32 %v514, 1.0
    %v541 = vadd.f32 %v516, 1.0
    %v542 = vadd.f32 %v518, 1.0
    %v543 = vadd.f32 %v520, 1.0
    %v544 = vadd.f32 %v522, 1.0
    %v545 = vadd.f32 %v524, 1.0
    %v546 = vadd.f32 %v526, 1.0
    %v547 = vadd.f32 %v528, 1.0
    %v548 = vadd.f32 %v530, 1.0
    %v549 = vadd.f32 %v532, 1.0
    %v550 = vadd.f32 %v534, 1.0
    %v551 = vrcp.pop %v535
    %v552 = vrcp.pop %v536
    %v553 = vrcp.pop %v537
    %v554 = vrcp.pop %v538
    %v555 = vrcp.pop %v539
    %v556 = vrcp.pop %v540
    %v557 = vrcp.pop %v541
    %v558 = vrcp.pop %v542
    %v559 = vrcp.pop %v543
    %v560 = vrcp.pop %v544
    %v561 = vrcp.pop %v545
    %v562 = vrcp.pop %v546
    %v563 = vrcp.pop %v547
    %v564 = vrcp.pop %v548
    %v565 = vrcp.pop %v549
    %v566 = vrcp.pop %v550
    %v567 = vpack.c.bf16 %v552, %v551
    %v568 = vpack.c.bf16 %v554, %v553
    %v569 = vpack.c.bf16 %v556, %v555
    %v570 = vpack.c.bf16 %v558, %v557
    %v571 = vpack.c.bf16 %v560, %v559
    %v572 = vpack.c.bf16 %v562, %v561
    %v573 = vpack.c.bf16 %v564, %v563
    %v574 = vpack.c.bf16 %v566, %v565
    %v583 = vunpack.c.l.b16 %v567
    %v584 = vunpack.c.h.b16 %v567
    %v585 = vunpack.c.l.b16 %v568
    %v586 = vunpack.c.h.b16 %v568
    %v587 = vunpack.c.l.b16 %v569
    %v588 = vunpack.c.h.b16 %v569
    %v589 = vunpack.c.l.b16 %v570
    %v590 = vunpack.c.h.b16 %v570
    %v591 = vunpack.c.l.b16 %v571
    %v592 = vunpack.c.h.b16 %v571
    %v593 = vunpack.c.l.b16 %v572
    %v594 = vunpack.c.h.b16 %v572
    %v595 = vunpack.c.l.b16 %v573
    %v596 = vunpack.c.h.b16 %v573
    %v597 = vunpack.c.l.b16 %v574
    %v598 = vunpack.c.h.b16 %v574
    %v599 = vpack.c.b16 %v583, %v583
    %v600 = vpack.c.b16 %v584, %v584
    %v601 = vpack.c.b16 %v585, %v585
    %v602 = vpack.c.b16 %v586, %v586
    %v603 = vpack.c.b16 %v587, %v587
    %v604 = vpack.c.b16 %v588, %v588
    %v605 = vpack.c.b16 %v589, %v589
    %v606 = vpack.c.b16 %v590, %v590
    %v607 = vpack.c.b16 %v591, %v591
    %v608 = vpack.c.b16 %v592, %v592
    %v609 = vpack.c.b16 %v593, %v593
    %v610 = vpack.c.b16 %v594, %v594
    %v611 = vpack.c.b16 %v595, %v595
    %v612 = vpack.c.b16 %v596, %v596
    %v613 = vpack.c.b16 %v597, %v597
    %v614 = vpack.c.b16 %v598, %v598
    %631 = vst [vmem:[#allocation8] sm:$0xf] %v599
    %632 = vst [vmem:[#allocation8 + $0x4] sm:$0xf] %v600
    %633 = vst [vmem:[#allocation8 + $0x8] sm:$0xf] %v601
    %634 = vst [vmem:[#allocation8 + $0xc] sm:$0xf] %v602
    %635 = vst [vmem:[#allocation8 + $0x10] sm:$0xf] %v603
    %636 = vst [vmem:[#allocation8 + $0x14] sm:$0xf] %v604
    %637 = vst [vmem:[#allocation8 + $0x18] sm:$0xf] %v605
    %638 = vst [vmem:[#allocation8 + $0x1c] sm:$0xf] %v606
    %639 = vst [vmem:[#allocation8 + $0x20] sm:$0xf] %v607
    %640 = vst [vmem:[#allocation8 + $0x24] sm:$0xf] %v608
    %641 = vst [vmem:[#allocation8 + $0x28] sm:$0xf] %v609
    %642 = vst [vmem:[#allocation8 + $0x2c] sm:$0xf] %v610
    %643 = vst [vmem:[#allocation8 + $0x30] sm:$0xf] %v611
    %644 = vst [vmem:[#allocation8 + $0x34] sm:$0xf] %v612
    %645 = vst [vmem:[#allocation8 + $0x38] sm:$0xf] %v613
    %646 = vst [vmem:[#allocation8 + $0x3c] sm:$0xf] %v614
    // Predicated region
    $region34: #{tpu_custom_call.1} parent=1 // pred_check
      _
    $region35: #{tpu_custom_call.1} parent=1 // pred_check_branch
      %648 = sbr.rel (0) target = $region37
    $region36: #{tpu_custom_call.1} parent=1 // pred_region
      %s650 = ssub.s32 1024, 1024
      %651 = vsyncadd [#allocation4], %s650
      %s652 = sshll.u32 [#allocation8], 4
      %s653 = int_to_ptr.vmem [resolvable:$true] %s652
      %658 = dma.vmem_to_hbm [thread:$0]  %s653, 1024, %s5, [#allocation4], 64, 64, 4
    $region37: #{tpu_custom_call.1} parent=1 // pred_fallthru
      _
    // Predicated region
    $region38: #{tpu_custom_call.1} parent=1 // pred_check
      _
    $region39: #{tpu_custom_call.1} parent=1 // pred_check_branch
      %660 = sbr.rel (0) target = $region41
    $region40: #{tpu_custom_call.1} parent=1 // pred_region
      %661 = dma.done [#allocation4], 1024
    $region41: #{tpu_custom_call.1} parent=1 // pred_fallthru
      _
    %662 = vsyncpa [#allocation3], 1
    %663 = vsyncpa [#allocation6], 1
    %664 = vsyncpa [#allocation4], 1

// kernel: tpu_custom_call.1
$region0: #{tpu_custom_call.1}
  #allocation0 [shape = 'u32[]', space=smem, size = 0x4, offset = 0x4, fixed_abs, tag = 'smem constant byte address 0x4 - core index']
  #allocation1 [shape = 'u32[144,128]{1,0:T(1,128)}', space=vmem, size = 0x12000, scoped, tag = 'internal scratch']
  %s0 = inlined_call_operand.hbm [shape: bf16[128,128], index: 0, kind: input, shape index: {}]
  %s1 = inlined_call_operand.hbm [shape: bf16[128,128], index: 1, kind: input, shape index: {}]
  %s2 = inlined_call_operand.vmem [shape: f32[1,128], index: 2, kind: input, shape index: {}]
  %s3 = inlined_call_operand.hbm [shape: bf16[128,128], index: 3, kind: input, shape index: {}]
  %s4 = inlined_call_operand.vmem [shape: f32[1,128], index: 4, kind: input, shape index: {}]
  %s5 = inlined_call_operand.hbm [shape: bf16[128,128], index: 5, kind: output, shape index: {}]
  %s6 = sld [smem:[#allocation0]]
  $region42: #{tpu_custom_call.1} parent=0
    _
  %s8 = ssub.s32 1, %s6
  %s9 = scalar_select 0, %s8, %s6
  $region1: #{tpu_custom_call.1} parent=0
    #allocation2 [shape = 'u8[32768]{0}', space=vmem, size = 0x8000, scoped, tag = 'input window, operand 0, single buffered']
    #allocation3 [shape = 's32[1]{0}', space=sflag, size = 0x4, scoped, tag = 'scoped memory for tpu_custom_call.1']
    #allocation4 [shape = 's32[1]{0}', space=sflag, size = 0x4, scoped, tag = 'scoped memory for tpu_custom_call.1']
    #allocation5 [shape = 'u8[32768]{0}', space=vmem, size = 0x8000, scoped, tag = 'input window, operand 1, single buffered']
    #allocation6 [shape = 's32[1]{0}', space=sflag, size = 0x4, scoped, tag = 'scoped memory for tpu_custom_call.1']
    #allocation7 [shape = 'u8[32768]{0}', space=vmem, size = 0x8000, scoped, tag = 'input window, operand 3, single buffered']
    #allocation8 [shape = 'u8[32768]{0}', space=vmem, size = 0x8000, scoped, tag = 'output window, operand 0, single buffered']
    %10 = vsyncpa [#allocation3], 0
    %11 = vsyncpa [#allocation6], 0
    %12 = vsyncpa [#allocation4], 0
    // Predicated region
    $region2: #{tpu_custom_call.1} parent=1 // pred_check
      _
    $region3: #{tpu_custom_call.1} parent=1 // pred_check_branch
      %14 = sbr.rel (0) target = $region5
    $region4: #{tpu_custom_call.1} parent=1 // pred_region
      %s16 = ssub.s32 1024, 1024
      %17 = vsyncadd [#allocation3], %s16
      %s18 = sshll.u32 [#allocation2], 4
      %s19 = int_to_ptr.vmem [resolvable:$true] %s18
      %24 = dma.hbm_to_vmem [thread:$0]  %s0, 1024, %s19, [#allocation3], 64, 64, 4
    $region5: #{tpu_custom_call.1} parent=1 // pred_fallthru
      _
    // Predicated region
    $region6: #{tpu_custom_call.1} parent=1 // pred_check
      _
    $region7: #{tpu_custom_call.1} parent=1 // pred_check_branch
      %26 = sbr.rel (0) target = $region9
    $region8: #{tpu_custom_call.1} parent=1 // pred_region
      %s28 = ssub.s32 1024, 1024
      %29 = vsyncadd [#allocation6], %s28
      %s30 = sshll.u32 [#allocation5], 4
      %s31 = int_to_ptr.vmem [resolvable:$true] %s30
      %36 = dma.hbm_to_vmem [thread:$0]  %s1, 1024, %s31, [#allocation6], 64, 64, 4
    $region9: #{tpu_custom_call.1} parent=1 // pred_fallthru
      _
    // Predicated region
    $region10: #{tpu_custom_call.1} parent=1 // pred_check
      _
    $region11: #{tpu_custom_call.1} parent=1 // pred_check_branch
      %38 = sbr.rel (0) target = $region13
    $region12: #{tpu_custom_call.1} parent=1 // pred_region
      _
    $region13: #{tpu_custom_call.1} parent=1 // pred_fallthru
      _
    // Predicated region
    $region14: #{tpu_custom_call.1} parent=1 // pred_check
      _
    $region15: #{tpu_custom_call.1} parent=1 // pred_check_branch
      %40 = sbr.rel (0) target = $region17
    $region16: #{tpu_custom_call.1} parent=1 // pred_region
      %s42 = ssub.s32 1024, 1024
      %43 = vsyncadd [#allocation6], %s42
      %s44 = sshll.u32 [#allocation7], 4
      %s45 = int_to_ptr.vmem [resolvable:$true] %s44
      %50 = dma.hbm_to_vmem [thread:$0]  %s3, 1024, %s45, [#allocation6], 64, 64, 4
    $region17: #{tpu_custom_call.1} parent=1 // pred_fallthru
      _
    // Predicated region
    $region18: #{tpu_custom_call.1} parent=1 // pred_check
      _
    $region19: #{tpu_custom_call.1} parent=1 // pred_check_branch
      %52 = sbr.rel (0) target = $region21
    $region20: #{tpu_custom_call.1} parent=1 // pred_region
      _
    $region21: #{tpu_custom_call.1} parent=1 // pred_fallthru
      _
    // Predicated region
    $region22: #{tpu_custom_call.1} parent=1 // pred_check
      _
    $region23: #{tpu_custom_call.1} parent=1 // pred_check_branch
      %54 = sbr.rel (0) target = $region25
    $region24: #{tpu_custom_call.1} parent=1 // pred_region
      %55 = dma.done [#allocation3], 1024
    $region25: #{tpu_custom_call.1} parent=1 // pred_fallthru
      _
    // Predicated region
    $region26: #{tpu_custom_call.1} parent=1 // pred_check
      _
    $region27: #{tpu_custom_call.1} parent=1 // pred_check_branch
      %57 = sbr.rel (0) target = $region29
    $region28: #{tpu_custom_call.1} parent=1 // pred_region
      %58 = dma.done [#allocation6], 1024
    $region29: #{tpu_custom_call.1} parent=1 // pred_fallthru
      _
    // Predicated region
    $region30: #{tpu_custom_call.1} parent=1 // pred_check
      _
    $region31: #{tpu_custom_call.1} parent=1 // pred_check_branch
      %60 = sbr.rel (0) target = $region33
    $region32: #{tpu_custom_call.1} parent=1 // pred_region
      %61 = dma.done [#allocation6], 1024
    $region33: #{tpu_custom_call.1} parent=1 // pred_fallthru
      _
    %v63 = vld [vmem:[#allocation2] sm:$0xf]
    %v64 = vld [vmem:[#allocation2 + $0x4] sm:$0xf]
    %v65 = vld [vmem:[#allocation2 + $0x8] sm:$0xf]
    %v66 = vld [vmem:[#allocation2 + $0xc] sm:$0xf]
    %v67 = vld [vmem:[#allocation2 + $0x10] sm:$0xf]
    %v68 = vld [vmem:[#allocation2 + $0x14] sm:$0xf]
    %v69 = vld [vmem:[#allocation2 + $0x18] sm:$0xf]
    %v70 = vld [vmem:[#allocation2 + $0x1c] sm:$0xf]
    %v71 = vld [vmem:[#allocation2 + $0x20] sm:$0xf]
    %v72 = vld [vmem:[#allocation2 + $0x24] sm:$0xf]
    %v73 = vld [vmem:[#allocation2 + $0x28] sm:$0xf]
    %v74 = vld [vmem:[#allocation2 + $0x2c] sm:$0xf]
    %v75 = vld [vmem:[#allocation2 + $0x30] sm:$0xf]
    %v76 = vld [vmem:[#allocation2 + $0x34] sm:$0xf]
    %v77 = vld [vmem:[#allocation2 + $0x38] sm:$0xf]
    %v78 = vld [vmem:[#allocation2 + $0x3c] sm:$0xf]
    %v79 = vld [vmem:[#allocation5] sm:$0xf]
    %v80 = vld [vmem:[#allocation5 + $0x4] sm:$0xf]
    %v81 = vld [vmem:[#allocation5 + $0x8] sm:$0xf]
    %v82 = vld [vmem:[#allocation5 + $0xc] sm:$0xf]
    %v83 = vld [vmem:[#allocation5 + $0x10] sm:$0xf]
    %v84 = vld [vmem:[#allocation5 + $0x14] sm:$0xf]
    %v85 = vld [vmem:[#allocation5 + $0x18] sm:$0xf]
    %v86 = vld [vmem:[#allocation5 + $0x1c] sm:$0xf]
    %v87 = vld [vmem:[#allocation5 + $0x20] sm:$0xf]
    %v88 = vld [vmem:[#allocation5 + $0x24] sm:$0xf]
    %v89 = vld [vmem:[#allocation5 + $0x28] sm:$0xf]
    %v90 = vld [vmem:[#allocation5 + $0x2c] sm:$0xf]
    %v91 = vld [vmem:[#allocation5 + $0x30] sm:$0xf]
    %v92 = vld [vmem:[#allocation5 + $0x34] sm:$0xf]
    %v93 = vld [vmem:[#allocation5 + $0x38] sm:$0xf]
    %v94 = vld [vmem:[#allocation5 + $0x3c] sm:$0xf]
    %v95 = vld [vmem:[%s2] sm:$0x1]
    %v97 = vlaneseq
    %v98 = vshrl.u32 %v97, 7
    %v99 = vsub.s32 0, %v98
    %v100 = vrot.slane %v95, %v99
    %v118 = vunpack.c.l.b16 %v63
    %v119 = vunpack.c.l.b16 %v64
    %v120 = vunpack.c.l.b16 %v65
    %v121 = vunpack.c.l.b16 %v66
    %v122 = vunpack.c.l.b16 %v67
    %v123 = vunpack.c.l.b16 %v68
    %v124 = vunpack.c.l.b16 %v69
    %v125 = vunpack.c.l.b16 %v70
    %v126 = vunpack.c.l.b16 %v71
    %v127 = vunpack.c.l.b16 %v72
    %v128 = vunpack.c.l.b16 %v73
    %v129 = vunpack.c.l.b16 %v74
    %v130 = vunpack.c.l.b16 %v75
    %v131 = vunpack.c.l.b16 %v76
    %v132 = vunpack.c.l.b16 %v77
    %v133 = vunpack.c.l.b16 %v78
    %v134 = vpack.c.b16 %v119, %v118
    %v135 = vpack.c.b16 %v121, %v120
    %v136 = vpack.c.b16 %v123, %v122
    %v137 = vpack.c.b16 %v125, %v124
    %v138 = vpack.c.b16 %v127, %v126
    %v139 = vpack.c.b16 %v129, %v128
    %v140 = vpack.c.b16 %v131, %v130
    %v141 = vpack.c.b16 %v133, %v132
    %v166 = vunpack.c.l.b16 %v79
    %v167 = vunpack.c.l.b16 %v80
    %v168 = vunpack.c.l.b16 %v81
    %v169 = vunpack.c.l.b16 %v82
    %v170 = vunpack.c.l.b16 %v83
    %v171 = vunpack.c.l.b16 %v84
    %v172 = vunpack.c.l.b16 %v85
    %v173 = vunpack.c.l.b16 %v86
    %v174 = vunpack.c.l.b16 %v87
    %v175 = vunpack.c.l.b16 %v88
    %v176 = vunpack.c.l.b16 %v89
    %v177 = vunpack.c.l.b16 %v90
    %v178 = vunpack.c.l.b16 %v91
    %v179 = vunpack.c.l.b16 %v92
    %v180 = vunpack.c.l.b16 %v93
    %v181 = vunpack.c.l.b16 %v94
    %v182 = vpack.c.b16 %v167, %v166
    %v183 = vpack.c.b16 %v169, %v168
    %v184 = vpack.c.b16 %v171, %v170
    %v185 = vpack.c.b16 %v173, %v172
    %v186 = vpack.c.b16 %v175, %v174
    %v187 = vpack.c.b16 %v177, %v176
    %v188 = vpack.c.b16 %v179, %v178
    %v189 = vpack.c.b16 %v181, %v180
    %198 = vmatprep.subr.bf16.mxu0 0
    %199 = vmatpush1.bf16.msra.mxu0 %v182
    %200 = vmatprep.subr.bf16.mxu0 0
    %201 = vmatpush1.bf16.msra.mxu0 %v183
    %202 = vmatprep.subr.bf16.mxu0 0
    %203 = vmatpush1.bf16.msra.mxu0 %v184
    %204 = vmatprep.subr.bf16.mxu0 0
    %205 = vmatpush1.bf16.msra.mxu0 %v185
    %206 = vmatprep.subr.bf16.mxu0 0
    %207 = vmatpush1.bf16.msra.mxu0 %v186
    %208 = vmatprep.subr.bf16.mxu0 0
    %209 = vmatpush1.bf16.msra.mxu0 %v187
    %210 = vmatprep.subr.bf16.mxu0 0
    %211 = vmatpush1.bf16.msra.mxu0 %v188
    %212 = vmatprep.subr.bf16.mxu0 0
    %213 = vmatpush1.bf16.msra.mxu0 %v189
    %214 = vmatprep.subr.bf16.mxu0 0
    %215 = vmatpush1.bf16.msra.mxu0 0
    %216 = vmatprep.subr.bf16.mxu0 0
    %217 = vmatpush1.bf16.msra.mxu0 0
    %218 = vmatprep.subr.bf16.mxu0 0
    %219 = vmatpush1.bf16.msra.mxu0 0
    %220 = vmatprep.subr.bf16.mxu0 0
    %221 = vmatpush1.bf16.msra.mxu0 0
    %222 = vmatprep.subr.bf16.mxu0 0
    %223 = vmatpush1.bf16.msra.mxu0 0
    %224 = vmatprep.subr.bf16.mxu0 0
    %225 = vmatpush1.bf16.msra.mxu0 0
    %226 = vmatprep.subr.bf16.mxu0 0
    %227 = vmatpush1.bf16.msra.mxu0 0
    %228 = vmatprep.subr.bf16.mxu0 0
    %229 = vmatpush1.bf16.msra.mxu0 0
    %230 = vmatprep.mubr.bf16.mxu0 0
    %231 = vmatmul.mubr.bf16.gmra.mrb[0].mxu0 %v134
    %v232 = vpop.f32.mrb[0].mxu0
    %v233 = vadd.f32 %v100, %v232
    %v234 = vpop.f32.mrb[0].mxu0
    %v235 = vpop.f32.mrb[0].mxu0
    %v236 = vadd.f32 %v100, %v235
    %v237 = vpop.f32.mrb[0].mxu0
    %238 = vmatprep.mubr.bf16.mxu0 0
    %239 = vmatmul.mubr.bf16.gmra.mrb[0].mxu0 %v135
    %v240 = vpop.f32.mrb[0].mxu0
    %v241 = vadd.f32 %v100, %v240
    %v242 = vpop.f32.mrb[0].mxu0
    %v243 = vpop.f32.mrb[0].mxu0
    %v244 = vadd.f32 %v100, %v243
    %v245 = vpop.f32.mrb[0].mxu0
    %246 = vmatprep.mubr.bf16.mxu0 0
    %247 = vmatmul.mubr.bf16.gmra.mrb[0].mxu0 %v136
    %v248 = vpop.f32.mrb[0].mxu0
    %v249 = vadd.f32 %v100, %v248
    %v250 = vpop.f32.mrb[0].mxu0
    %v251 = vpop.f32.mrb[0].mxu0
    %v252 = vadd.f32 %v100, %v251
    %v253 = vpop.f32.mrb[0].mxu0
    %254 = vmatprep.mubr.bf16.mxu0 0
    %255 = vmatmul.mubr.bf16.gmra.mrb[0].mxu0 %v137
    %v256 = vpop.f32.mrb[0].mxu0
    %v257 = vadd.f32 %v100, %v256
    %v258 = vpop.f32.mrb[0].mxu0
    %v259 = vpop.f32.mrb[0].mxu0
    %v260 = vadd.f32 %v100, %v259
    %v261 = vpop.f32.mrb[0].mxu0
    %262 = vmatprep.mubr.bf16.mxu0 0
    %263 = vmatmul.mubr.bf16.gmra.mrb[0].mxu0 %v138
    %v264 = vpop.f32.mrb[0].mxu0
    %v265 = vadd.f32 %v100, %v264
    %v266 = vpop.f32.mrb[0].mxu0
    %v267 = vpop.f32.mrb[0].mxu0
    %v268 = vadd.f32 %v100, %v267
    %v269 = vpop.f32.mrb[0].mxu0
    %270 = vmatprep.mubr.bf16.mxu0 0
    %271 = vmatmul.mubr.bf16.gmra.mrb[0].mxu0 %v139
    %v272 = vpop.f32.mrb[0].mxu0
    %v273 = vadd.f32 %v100, %v272
    %v274 = vpop.f32.mrb[0].mxu0
    %v275 = vpop.f32.mrb[0].mxu0
    %v276 = vadd.f32 %v100, %v275
    %v277 = vpop.f32.mrb[0].mxu0
    %278 = vmatprep.mubr.bf16.mxu0 0
    %279 = vmatmul.mubr.bf16.gmra.mrb[0].mxu0 %v140
    %v280 = vpop.f32.mrb[0].mxu0
    %v281 = vadd.f32 %v100, %v280
    %v282 = vpop.f32.mrb[0].mxu0
    %v283 = vpop.f32.mrb[0].mxu0
    %v284 = vadd.f32 %v100, %v283
    %v285 = vpop.f32.mrb[0].mxu0
    %286 = vmatprep.mubr.bf16.mxu0 0
    %287 = vmatmul.mubr.bf16.gmra.mrb[0].mxu0 %v141
    %v288 = vpop.f32.mrb[0].mxu0
    %v289 = vadd.f32 %v100, %v288
    %v290 = vpop.f32.mrb[0].mxu0
    %v291 = vpop.f32.mrb[0].mxu0
    %v292 = vadd.f32 %v100, %v291
    %v293 = vpop.f32.mrb[0].mxu0
    %294 = vdwg.mxu0
    %v295 = vmax.f32 %v233, 0.0
    %v296 = vmax.f32 %v236, 0.0
    %v297 = vmax.f32 %v241, 0.0
    %v298 = vmax.f32 %v244, 0.0
    %v299 = vmax.f32 %v249, 0.0
    %v300 = vmax.f32 %v252, 0.0
    %v301 = vmax.f32 %v257, 0.0
    %v302 = vmax.f32 %v260, 0.0
    %v303 = vmax.f32 %v265, 0.0
    %v304 = vmax.f32 %v268, 0.0
    %v305 = vmax.f32 %v273, 0.0
    %v306 = vmax.f32 %v276, 0.0
    %v307 = vmax.f32 %v281, 0.0
    %v308 = vmax.f32 %v284, 0.0
    %v309 = vmax.f32 %v289, 0.0
    %v310 = vmax.f32 %v292, 0.0
    %v311 = vpack.c.bf16 %v296, %v295
    %v312 = vpack.c.bf16 %v298, %v297
    %v313 = vpack.c.bf16 %v300, %v299
    %v314 = vpack.c.bf16 %v302, %v301
    %v315 = vpack.c.bf16 %v304, %v303
    %v316 = vpack.c.bf16 %v306, %v305
    %v317 = vpack.c.bf16 %v308, %v307
    %v318 = vpack.c.bf16 %v310, %v309
    %v319 = vld [vmem:[#allocation7] sm:$0xf]
    %v320 = vld [vmem:[#allocation7 + $0x4] sm:$0xf]
    %v321 = vld [vmem:[#allocation7 + $0x8] sm:$0xf]
    %v322 = vld [vmem:[#allocation7 + $0xc] sm:$0xf]
    %v323 = vld [vmem:[#allocation7 + $0x10] sm:$0xf]
    %v324 = vld [vmem:[#allocation7 + $0x14] sm:$0xf]
    %v325 = vld [vmem:[#allocation7 + $0x18] sm:$0xf]
    %v326 = vld [vmem:[#allocation7 + $0x1c] sm:$0xf]
    %v327 = vld [vmem:[#allocation7 + $0x20] sm:$0xf]
    %v328 = vld [vmem:[#allocation7 + $0x24] sm:$0xf]
    %v329 = vld [vmem:[#allocation7 + $0x28] sm:$0xf]
    %v330 = vld [vmem:[#allocation7 + $0x2c] sm:$0xf]
    %v331 = vld [vmem:[#allocation7 + $0x30] sm:$0xf]
    %v332 = vld [vmem:[#allocation7 + $0x34] sm:$0xf]
    %v333 = vld [vmem:[#allocation7 + $0x38] sm:$0xf]
    %v334 = vld [vmem:[#allocation7 + $0x3c] sm:$0xf]
    %v335 = vld [vmem:[%s4] sm:$0x1]
    %v337 = vlaneseq
    %v338 = vshrl.u32 %v337, 7
    %v339 = vsub.s32 0, %v338
    %v340 = vrot.slane %v335, %v339
    %v358 = vunpack.c.l.b16 %v319
    %v359 = vunpack.c.l.b16 %v320
    %v360 = vunpack.c.l.b16 %v321
    %v361 = vunpack.c.l.b16 %v322
    %v362 = vunpack.c.l.b16 %v323
    %v363 = vunpack.c.l.b16 %v324
    %v364 = vunpack.c.l.b16 %v325
    %v365 = vunpack.c.l.b16 %v326
    %v366 = vunpack.c.l.b16 %v327
    %v367 = vunpack.c.l.b16 %v328
    %v368 = vunpack.c.l.b16 %v329
    %v369 = vunpack.c.l.b16 %v330
    %v370 = vunpack.c.l.b16 %v331
    %v371 = vunpack.c.l.b16 %v332
    %v372 = vunpack.c.l.b16 %v333
    %v373 = vunpack.c.l.b16 %v334
    %v374 = vpack.c.b16 %v359, %v358
    %v375 = vpack.c.b16 %v361, %v360
    %v376 = vpack.c.b16 %v363, %v362
    %v377 = vpack.c.b16 %v365, %v364
    %v378 = vpack.c.b16 %v367, %v366
    %v379 = vpack.c.b16 %v369, %v368
    %v380 = vpack.c.b16 %v371, %v370
    %v381 = vpack.c.b16 %v373, %v372
    %390 = vmatprep.subr.bf16.mxu0 0
    %391 = vmatpush1.bf16.msra.mxu0 %v374
    %392 = vmatprep.subr.bf16.mxu0 0
    %393 = vmatpush1.bf16.msra.mxu0 %v375
    %394 = vmatprep.subr.bf16.mxu0 0
    %395 = vmatpush1.bf16.msra.mxu0 %v376
    %396 = vmatprep.subr.bf16.mxu0 0
    %397 = vmatpush1.bf16.msra.mxu0 %v377
    %398 = vmatprep.subr.bf16.mxu0 0
    %399 = vmatpush1.bf16.msra.mxu0 %v378
    %400 = vmatprep.subr.bf16.mxu0 0
    %401 = vmatpush1.bf16.msra.mxu0 %v379
    %402 = vmatprep.subr.bf16.mxu0 0
    %403 = vmatpush1.bf16.msra.mxu0 %v380
    %404 = vmatprep.subr.bf16.mxu0 0
    %405 = vmatpush1.bf16.msra.mxu0 %v381
    %406 = vmatprep.subr.bf16.mxu0 0
    %407 = vmatpush1.bf16.msra.mxu0 0
    %408 = vmatprep.subr.bf16.mxu0 0
    %409 = vmatpush1.bf16.msra.mxu0 0
    %410 = vmatprep.subr.bf16.mxu0 0
    %411 = vmatpush1.bf16.msra.mxu0 0
    %412 = vmatprep.subr.bf16.mxu0 0
    %413 = vmatpush1.bf16.msra.mxu0 0
    %414 = vmatprep.subr.bf16.mxu0 0
    %415 = vmatpush1.bf16.msra.mxu0 0
    %416 = vmatprep.subr.bf16.mxu0 0
    %417 = vmatpush1.bf16.msra.mxu0 0
    %418 = vmatprep.subr.bf16.mxu0 0
    %419 = vmatpush1.bf16.msra.mxu0 0
    %420 = vmatprep.subr.bf16.mxu0 0
    %421 = vmatpush1.bf16.msra.mxu0 0
    %422 = vmatprep.mubr.bf16.mxu0 0
    %423 = vmatmul.mubr.bf16.gmra.mrb[0].mxu0 %v311
    %v424 = vpop.f32.mrb[0].mxu0
    %v425 = vadd.f32 %v340, %v424
    %v426 = vpop.f32.mrb[0].mxu0
    %v427 = vpop.f32.mrb[0].mxu0
    %v428 = vadd.f32 %v340, %v427
    %v429 = vpop.f32.mrb[0].mxu0
    %430 = vmatprep.mubr.bf16.mxu0 0
    %431 = vmatmul.mubr.bf16.gmra.mrb[0].mxu0 %v312
    %v432 = vpop.f32.mrb[0].mxu0
    %v433 = vadd.f32 %v340, %v432
    %v434 = vpop.f32.mrb[0].mxu0
    %v435 = vpop.f32.mrb[0].mxu0
    %v436 = vadd.f32 %v340, %v435
    %v437 = vpop.f32.mrb[0].mxu0
    %438 = vmatprep.mubr.bf16.mxu0 0
    %439 = vmatmul.mubr.bf16.gmra.mrb[0].mxu0 %v313
    %v440 = vpop.f32.mrb[0].mxu0
    %v441 = vadd.f32 %v340, %v440
    %v442 = vpop.f32.mrb[0].mxu0
    %v443 = vpop.f32.mrb[0].mxu0
    %v444 = vadd.f32 %v340, %v443
    %v445 = vpop.f32.mrb[0].mxu0
    %446 = vmatprep.mubr.bf16.mxu0 0
    %447 = vmatmul.mubr.bf16.gmra.mrb[0].mxu0 %v314
    %v448 = vpop.f32.mrb[0].mxu0
    %v449 = vadd.f32 %v340, %v448
    %v450 = vpop.f32.mrb[0].mxu0
    %v451 = vpop.f32.mrb[0].mxu0
    %v452 = vadd.f32 %v340, %v451
    %v453 = vpop.f32.mrb[0].mxu0
    %454 = vmatprep.mubr.bf16.mxu0 0
    %455 = vmatmul.mubr.bf16.gmra.mrb[0].mxu0 %v315
    %v456 = vpop.f32.mrb[0].mxu0
    %v457 = vadd.f32 %v340, %v456
    %v458 = vpop.f32.mrb[0].mxu0
    %v459 = vpop.f32.mrb[0].mxu0
    %v460 = vadd.f32 %v340, %v459
    %v461 = vpop.f32.mrb[0].mxu0
    %462 = vmatprep.mubr.bf16.mxu0 0
    %463 = vmatmul.mubr.bf16.gmra.mrb[0].mxu0 %v316
    %v464 = vpop.f32.mrb[0].mxu0
    %v465 = vadd.f32 %v340, %v464
    %v466 = vpop.f32.mrb[0].mxu0
    %v467 = vpop.f32.mrb[0].mxu0
    %v468 = vadd.f32 %v340, %v467
    %v469 = vpop.f32.mrb[0].mxu0
    %470 = vmatprep.mubr.bf16.mxu0 0
    %471 = vmatmul.mubr.bf16.gmra.mrb[0].mxu0 %v317
    %v472 = vpop.f32.mrb[0].mxu0
    %v473 = vadd.f32 %v340, %v472
    %v474 = vpop.f32.mrb[0].mxu0
    %v475 = vpop.f32.mrb[0].mxu0
    %v476 = vadd.f32 %v340, %v475
    %v477 = vpop.f32.mrb[0].mxu0
    %478 = vmatprep.mubr.bf16.mxu0 0
    %479 = vmatmul.mubr.bf16.gmra.mrb[0].mxu0 %v318
    %v480 = vpop.f32.mrb[0].mxu0
    %v481 = vadd.f32 %v340, %v480
    %v482 = vpop.f32.mrb[0].mxu0
    %v483 = vpop.f32.mrb[0].mxu0
    %v484 = vadd.f32 %v340, %v483
    %v485 = vpop.f32.mrb[0].mxu0
    %486 = vdwg.mxu0
    %v487 = vsub.f32 0.0, %v425
    %v488 = vsub.f32 0.0, %v428
    %v489 = vsub.f32 0.0, %v433
    %v490 = vsub.f32 0.0, %v436
    %v491 = vsub.f32 0.0, %v441
    %v492 = vsub.f32 0.0, %v444
    %v493 = vsub.f32 0.0, %v449
    %v494 = vsub.f32 0.0, %v452
    %v495 = vsub.f32 0.0, %v457
    %v496 = vsub.f32 0.0, %v460
    %v497 = vsub.f32 0.0, %v465
    %v498 = vsub.f32 0.0, %v468
    %v499 = vsub.f32 0.0, %v473
    %v500 = vsub.f32 0.0, %v476
    %v501 = vsub.f32 0.0, %v481
    %v502 = vsub.f32 0.0, %v484
    %v503 = vmul.f32 %v487, 1.442695
    %v504 = vpow.pop %v503
    %v505 = vmul.f32 %v488, 1.442695
    %v506 = vpow.pop %v505
    %v507 = vmul.f32 %v489, 1.442695
    %v508 = vpow.pop %v507
    %v509 = vmul.f32 %v490, 1.442695
    %v510 = vpow.pop %v509
    %v511 = vmul.f32 %v491, 1.442695
    %v512 = vpow.pop %v511
    %v513 = vmul.f32 %v492, 1.442695
    %v514 = vpow.pop %v513
    %v515 = vmul.f32 %v493, 1.442695
    %v516 = vpow.pop %v515
    %v517 = vmul.f32 %v494, 1.442695
    %v518 = vpow.pop %v517
    %v519 = vmul.f32 %v495, 1.442695
    %v520 = vpow.pop %v519
    %v521 = vmul.f32 %v496, 1.442695
    %v522 = vpow.pop %v521
    %v523 = vmul.f32 %v497, 1.442695
    %v524 = vpow.pop %v523
    %v525 = vmul.f32 %v498, 1.442695
    %v526 = vpow.pop %v525
    %v527 = vmul.f32 %v499, 1.442695
    %v528 = vpow.pop %v527
    %v529 = vmul.f32 %v500, 1.442695
    %v530 = vpow.pop %v529
    %v531 = vmul.f32 %v501, 1.442695
    %v532 = vpow.pop %v531
    %v533 = vmul.f32 %v502, 1.442695
    %v534 = vpow.pop %v533
    %v535 = vadd.f32 %v504, 1.0
    %v536 = vadd.f32 %v506, 1.0
    %v537 = vadd.f32 %v508, 1.0
    %v538 = vadd.f32 %v510, 1.0
    %v539 = vadd.f32 %v512, 1.0
    %v540 = vadd.f32 %v514, 1.0
    %v541 = vadd.f32 %v516, 1.0
    %v542 = vadd.f32 %v518, 1.0
    %v543 = vadd.f32 %v520, 1.0
    %v544 = vadd.f32 %v522, 1.0
    %v545 = vadd.f32 %v524, 1.0
    %v546 = vadd.f32 %v526, 1.0
    %v547 = vadd.f32 %v528, 1.0
    %v548 = vadd.f32 %v530, 1.0
    %v549 = vadd.f32 %v532, 1.0
    %v550 = vadd.f32 %v534, 1.0
    %v551 = vrcp.pop %v535
    %v552 = vrcp.pop %v536
    %v553 = vrcp.pop %v537
    %v554 = vrcp.pop %v538
    %v555 = vrcp.pop %v539
    %v556 = vrcp.pop %v540
    %v557 = vrcp.pop %v541
    %v558 = vrcp.pop %v542
    %v559 = vrcp.pop %v543
    %v560 = vrcp.pop %v544
    %v561 = vrcp.pop %v545
    %v562 = vrcp.pop %v546
    %v563 = vrcp.pop %v547
    %v564 = vrcp.pop %v548
    %v565 = vrcp.pop %v549
    %v566 = vrcp.pop %v550
    %v567 = vpack.c.bf16 %v552, %v551
    %v568 = vpack.c.bf16 %v554, %v553
    %v569 = vpack.c.bf16 %v556, %v555
    %v570 = vpack.c.bf16 %v558, %v557
    %v571 = vpack.c.bf16 %v560, %v559
    %v572 = vpack.c.bf16 %v562, %v561
    %v573 = vpack.c.bf16 %v564, %v563
    %v574 = vpack.c.bf16 %v566, %v565
    %v583 = vunpack.c.l.b16 %v567
    %v584 = vunpack.c.h.b16 %v567
    %v585 = vunpack.c.l.b16 %v568
    %v586 = vunpack.c.h.b16 %v568
    %v587 = vunpack.c.l.b16 %v569
    %v588 = vunpack.c.h.b16 %v569
    %v589 = vunpack.c.l.b16 %v570
    %v590 = vunpack.c.h.b16 %v570
    %v591 = vunpack.c.l.b16 %v571
    %v592 = vunpack.c.h.b16 %v571
    %v593 = vunpack.c.l.b16 %v572
    %v594 = vunpack.c.h.b16 %v572
    %v595 = vunpack.c.l.b16 %v573
    %v596 = vunpack.c.h.b16 %v573
    %v597 = vunpack.c.l.b16 %v574
    %v598 = vunpack.c.h.b16 %v574
    %v599 = vpack.c.b16 %v583, %v583
    %v600 = vpack.c.b16 %v584, %v584
    %v601 = vpack.c.b16 %v585, %v585
    %v602 = vpack.c.b16 %v586, %v586
    %v603 = vpack.c.b16 %v587, %v587
    %v604 = vpack.c.b16 %v588, %v588
    %v605 = vpack.c.b16 %v589, %v589
    %v606 = vpack.c.b16 %v590, %v590
    %v607 = vpack.c.b16 %v591, %v591
    %v608 = vpack.c.b16 %v592, %v592
    %v609 = vpack.c.b16 %v593, %v593
    %v610 = vpack.c.b16 %v594, %v594
    %v611 = vpack.c.b16 %v595, %v595
    %v612 = vpack.c.b16 %v596, %v596
    %v613 = vpack.c.b16 %v597, %v597
    %v614 = vpack.c.b16 %v598, %v598
    %631 = vst [vmem:[#allocation8] sm:$0xf] %v599
    %632 = vst [vmem:[#allocation8 + $0x4] sm:$0xf] %v600
    %633 = vst [vmem:[#allocation8 + $0x8] sm:$0xf] %v601
    %634 = vst [vmem:[#allocation8 + $0xc] sm:$0xf] %v602
    %635 = vst [vmem:[#allocation8 + $0x10] sm:$0xf] %v603
    %636 = vst [vmem:[#allocation8 + $0x14] sm:$0xf] %v604
    %637 = vst [vmem:[#allocation8 + $0x18] sm:$0xf] %v605
    %638 = vst [vmem:[#allocation8 + $0x1c] sm:$0xf] %v606
    %639 = vst [vmem:[#allocation8 + $0x20] sm:$0xf] %v607
    %640 = vst [vmem:[#allocation8 + $0x24] sm:$0xf] %v608
    %641 = vst [vmem:[#allocation8 + $0x28] sm:$0xf] %v609
    %642 = vst [vmem:[#allocation8 + $0x2c] sm:$0xf] %v610
    %643 = vst [vmem:[#allocation8 + $0x30] sm:$0xf] %v611
    %644 = vst [vmem:[#allocation8 + $0x34] sm:$0xf] %v612
    %645 = vst [vmem:[#allocation8 + $0x38] sm:$0xf] %v613
    %646 = vst [vmem:[#allocation8 + $0x3c] sm:$0xf] %v614
    // Predicated region
    $region34: #{tpu_custom_call.1} parent=1 // pred_check
      _
    $region35: #{tpu_custom_call.1} parent=1 // pred_check_branch
      %648 = sbr.rel (0) target = $region37
    $region36: #{tpu_custom_call.1} parent=1 // pred_region
      %s650 = ssub.s32 1024, 1024
      %651 = vsyncadd [#allocation4], %s650
      %s652 = sshll.u32 [#allocation8], 4
      %s653 = int_to_ptr.vmem [resolvable:$true] %s652
      %658 = dma.vmem_to_hbm [thread:$0]  %s653, 1024, %s5, [#allocation4], 64, 64, 4
    $region37: #{tpu_custom_call.1} parent=1 // pred_fallthru
      _
    // Predicated region
    $region38: #{tpu_custom_call.1} parent=1 // pred_check
      _
    $region39: #{tpu_custom_call.1} parent=1 // pred_check_branch
      %660 = sbr.rel (0) target = $region41
    $region40: #{tpu_custom_call.1} parent=1 // pred_region
      %661 = dma.done [#allocation4], 1024
    $region41: #{tpu_custom_call.1} parent=1 // pred_fallthru
      _
    %662 = vsyncpa [#allocation3], 1
    %663 = vsyncpa [#allocation6], 1
    %664 = vsyncpa [#allocation4], 1

</llo_original>
